<compile_context>
chip_gen: v6e
topology: v6e:2x2x1
jax: 0.10.0
libtpu: 0.0.40
codegen_flags: <defaults>
</compile_context>

<pallas_src>
import functools

import jax
import jax.numpy as jnp
from jax import lax
from jax.experimental import pallas as pl
from jax.experimental.pallas import tpu as pltpu

SH_C0 = 0.28209479177387814
SH_C1 = 0.4886025119029199
SH_C2 = [1.0925484305920792, -1.0925484305920792, 0.31539156525252005,
         -1.0925484305920792, 0.5462742152960396]
SH_C3 = [-0.5900435899266435, 2.890611442640554, -0.4570457994644658,
         0.3731763325901154, -0.4570457994644658, 1.445305721320277,
         -0.5900435899266435]
SH_C4 = [2.5033429417967046, -1.7701307697799304, 0.9461746957575601,
         -0.6690465435572892, 0.10578554691520431, -0.6690465435572892,
         0.47308734787878004, -1.7701307697799304, 0.6258357354491761]

_LANES = 128
_SUBLANES = 8


def _sh_basis(x, y, z, n_dim):
    """List of n_dim SH basis arrays, each shaped like x (trace-time unrolled)."""
    cols = [jnp.full_like(x, SH_C0)]
    if n_dim > 1:
        cols += [-SH_C1 * y, SH_C1 * z, -SH_C1 * x]
        if n_dim > 4:
            xx, yy, zz = x * x, y * y, z * z
            xy, yz, xz = x * y, y * z, x * z
            cols += [
                SH_C2[0] * xy,
                SH_C2[1] * yz,
                SH_C2[2] * (2.0 * zz - xx - yy),
                SH_C2[3] * xz,
                SH_C2[4] * (xx - yy),
            ]
            if n_dim > 9:
                cols += [
                    SH_C3[0] * y * (3.0 * xx - yy),
                    SH_C3[1] * xy * z,
                    SH_C3[2] * y * (4.0 * zz - xx - yy),
                    SH_C3[3] * z * (2.0 * zz - 3.0 * xx - 3.0 * yy),
                    SH_C3[4] * x * (4.0 * zz - xx - yy),
                    SH_C3[5] * z * (xx - yy),
                    SH_C3[6] * x * (xx - 3.0 * yy),
                ]
                if n_dim > 16:
                    cols += [
                        SH_C4[0] * xy * (xx - yy),
                        SH_C4[1] * yz * (3.0 * xx - yy),
                        SH_C4[2] * xy * (7.0 * zz - 1.0),
                        SH_C4[3] * yz * (7.0 * zz - 3.0),
                        SH_C4[4] * (zz * (35.0 * zz - 30.0) + 3.0),
                        SH_C4[5] * xz * (7.0 * zz - 3.0),
                        SH_C4[6] * (xx - yy) * (7.0 * zz - 1.0),
                        SH_C4[7] * xz * (xx - 3.0 * yy),
                        SH_C4[8] * (xx * (xx - 3.0 * yy) - yy * (3.0 * xx - yy)),
                    ]
    return cols


def sh_rgb_kernel(rgb_sh_ref, dir_ref, out_ref, *, n_dim):
    """Blocks: rgb_sh_ref (3*n_dim, TR, 128), dir_ref (3, TR, 128), out_ref (3, TR, 128)."""
    tile_rows = dir_ref.shape[1]
    # Walk the block in 8-sublane chunks: each SH basis slab is then ~1 vreg,
    # keeping register pressure low while the DMA block stays large.
    for r0 in range(0, tile_rows, _SUBLANES):
        r1 = r0 + _SUBLANES
        x = dir_ref[0, r0:r1, :].astype(jnp.float32)
        y = dir_ref[1, r0:r1, :].astype(jnp.float32)
        z = dir_ref[2, r0:r1, :].astype(jnp.float32)

        # normalize(v) = v / max(||v||, 1e-12)  ==  v * rsqrt(max(||v||^2, 1e-24))
        inv = lax.rsqrt(jnp.maximum(x * x + y * y + z * z, 1e-24))
        x = x * inv
        y = y * inv
        z = z * inv

        sh = _sh_basis(x, y, z, n_dim)            # n_dim arrays of (8, 128)

        for c in range(3):
            base = c * n_dim

            def coeff(k, _base=base, _r0=r0, _r1=r1):
                return rgb_sh_ref[_base + k, _r0:_r1, :].astype(jnp.float32)

            # Degree-0 term folded in as a scalar multiply (no broadcast needed).
            acc0 = SH_C0 * coeff(0)
            if n_dim == 1:
                out_ref[c, r0:r1, :] = acc0.astype(out_ref.dtype)
                continue

            n_par = min(4, n_dim)                 # independent partial sums
            parts = [acc0] + [sh[k] * coeff(k) for k in range(1, n_par)]
            for k in range(n_par, n_dim):
                parts[k % n_par] = parts[k % n_par] + sh[k] * coeff(k)
            acc = parts[0]
            for p in parts[1:]:
                acc = acc + p
            out_ref[c, r0:r1, :] = acc.astype(out_ref.dtype)   # lane-dense store


def sh_rgb(rgb_sh, viewdir, *, in_dim, tile_rows=64):
    """Pallas implementation of SH_RGB.forward.

    rgb_sh : (N, in_dim) with in_dim = 3 * n_dim
    viewdir: (N, 3)
    returns: (N, 3)
    """
    assert in_dim % 3 == 0 and in_dim // 3 in (1, 4, 9, 16, 25)
    assert tile_rows % _SUBLANES == 0
    n_dim = in_dim // 3
    N = rgb_sh.shape[0]
    assert rgb_sh.shape == (N, in_dim)
    assert viewdir.shape == (N, 3)

    block_pts = tile_rows * _LANES                # points per grid step
    n_blocks = pl.cdiv(N, block_pts)
    n_pad = n_blocks * block_pts

    # Feature-major, point-folded layout: (feat, rows, 128), points on lanes.
    rgb_sh_t = jnp.transpose(rgb_sh)              # (in_dim, N)
    dir_t = jnp.transpose(viewdir)                # (3, N)
    if n_pad != N:
        rgb_sh_t = jnp.pad(rgb_sh_t, ((0, 0), (0, n_pad - N)))
        dir_t = jnp.pad(dir_t, ((0, 0), (0, n_pad - N)))
    rows = n_pad // _LANES
    rgb_sh_f = rgb_sh_t.reshape(in_dim, rows, _LANES)
    dir_f = dir_t.reshape(3, rows, _LANES)

    # Advisory cost hint for the XLA scheduler (kernel is HBM-bound).
    itemsize = jnp.dtype(rgb_sh.dtype).itemsize
    cost = pl.CostEstimate(
        flops=int(n_pad * (9 + 6 * n_dim + 6 * n_dim)),
        transcendentals=int(n_pad),
        bytes_accessed=int(n_pad * (in_dim + 3 + 3) * itemsize),
    )

    kernel = functools.partial(sh_rgb_kernel, n_dim=n_dim)
    out_f = pl.pallas_call(
        kernel,
        out_shape=jax.ShapeDtypeStruct((3, rows, _LANES), rgb_sh.dtype),
        grid=(rows // tile_rows,),
        in_specs=[
            pl.BlockSpec((in_dim, tile_rows, _LANES), lambda i: (0, i, 0)),
            pl.BlockSpec((3, tile_rows, _LANES), lambda i: (0, i, 0)),
        ],
        out_specs=pl.BlockSpec((3, tile_rows, _LANES), lambda i: (0, i, 0)),
        compiler_params=pltpu.CompilerParams(
            dimension_semantics=("parallel",)),
        cost_estimate=cost,
    )(rgb_sh_f, dir_f)

    out = out_f.reshape(3, n_pad)[:, :N]
    return jnp.transpose(out)                     # (N, 3)


def _sh_rgb_ref(rgb_sh, viewdir, n_dim):
    """Pure-JAX reference (mirrors the PyTorch module)."""
    v = viewdir.astype(jnp.float32)
    norm = jnp.sqrt(jnp.sum(v * v, axis=-1, keepdims=True))
    v = v / jnp.maximum(norm, 1e-12)
    x, y, z = v[:, 0:1], v[:, 1:2], v[:, 2:3]
    sh = jnp.concatenate(_sh_basis(x, y, z, n_dim), axis=-1)      # (N, n_dim)
    coeffs = rgb_sh.astype(jnp.float32).reshape(-1, 3, n_dim)
    return jnp.sum(sh[:, None, :] * coeffs, axis=-1).astype(rgb_sh.dtype)


if __name__ == "__main__":
    key = jax.random.PRNGKey(0)
    k1, k2 = jax.random.split(key)

    # Degree-4 SH (25 coeffs per channel), N not a multiple of the block size
    # so the padding / multi-step-grid path is exercised.
    in_dim = 75
    n_points = 2000

    rgb_sh = jax.random.normal(k1, (n_points, in_dim), dtype=jnp.float32)
    viewdir = jax.random.normal(k2, (n_points, 3), dtype=jnp.float32)

    out = sh_rgb(rgb_sh, viewdir, in_dim=in_dim, tile_rows=8)     # grid of 2 steps
    out = jax.block_until_ready(out)
    ref = _sh_rgb_ref(rgb_sh, viewdir, in_dim // 3)
    assert out.shape == (n_points, 3)
    assert jnp.allclose(out, ref, atol=1e-4, rtol=1e-3), float(
        jnp.max(jnp.abs(out - ref)))

    # Also check the default (large-tile) configuration and a low SH degree.
    in_dim2 = 12
    rgb_sh2 = jax.random.normal(k1, (n_points, in_dim2), dtype=jnp.float32)
    out2 = jax.block_until_ready(sh_rgb(rgb_sh2, viewdir, in_dim=in_dim2))
    ref2 = _sh_rgb_ref(rgb_sh2, viewdir, in_dim2 // 3)
    assert jnp.allclose(out2, ref2, atol=1e-4, rtol=1e-3)

    # Degree-0 (DC-only) path.
    in_dim3 = 3
    rgb_sh3 = jax.random.normal(k2, (n_points, in_dim3), dtype=jnp.float32)
    out3 = jax.block_until_ready(sh_rgb(rgb_sh3, viewdir, in_dim=in_dim3))
    ref3 = _sh_rgb_ref(rgb_sh3, viewdir, 1)
    assert jnp.allclose(out3, ref3, atol=1e-4, rtol=1e-3)

    print("KERNEL_OK")
</pallas_src>

<mosaic_0001>
module attributes {stable_mosaic.version = 11 : i64} {
  func.func @sh_rgb_kernel(%arg0: i32, %arg1: memref<75x8x128xf32, #tpu.memory_space<vmem>>, %arg2: memref<3x8x128xf32, #tpu.memory_space<vmem>>, %arg3: memref<3x8x128xf32, #tpu.memory_space<vmem>>) attributes {dimension_semantics = [#tpu.dimension_semantics<parallel>], iteration_bounds = array<i64: 2>, scalar_prefetch = 0 : i64, scratch_operands = 0 : i64, tpu.core_type = #tpu.core_type<tc>, window_params = [{transform_indices = @transform_0, window_bounds = array<i64: 75, 8, 128>}, {transform_indices = @transform_1, window_bounds = array<i64: 3, 8, 128>}, {transform_indices = @transform_2, window_bounds = array<i64: 3, 8, 128>}]} {
    %c0 = arith.constant 0 : index
    %c0_0 = arith.constant 0 : index
    %c0_1 = arith.constant 0 : index
    %0 = vector.load %arg2[%c0, %c0_0, %c0_1] : memref<3x8x128xf32, #tpu.memory_space<vmem>>, vector<1x8x128xf32>
    %1 = vector.shape_cast %0 : vector<1x8x128xf32> to vector<8x128xf32>
    %c1 = arith.constant 1 : index
    %c0_2 = arith.constant 0 : index
    %c0_3 = arith.constant 0 : index
    %2 = vector.load %arg2[%c1, %c0_2, %c0_3] : memref<3x8x128xf32, #tpu.memory_space<vmem>>, vector<1x8x128xf32>
    %3 = vector.shape_cast %2 : vector<1x8x128xf32> to vector<8x128xf32>
    %c2 = arith.constant 2 : index
    %c0_4 = arith.constant 0 : index
    %c0_5 = arith.constant 0 : index
    %4 = vector.load %arg2[%c2, %c0_4, %c0_5] : memref<3x8x128xf32, #tpu.memory_space<vmem>>, vector<1x8x128xf32>
    %5 = vector.shape_cast %4 : vector<1x8x128xf32> to vector<8x128xf32>
    %6 = arith.mulf %1, %1 : vector<8x128xf32>
    %7 = arith.mulf %3, %3 : vector<8x128xf32>
    %8 = arith.addf %6, %7 : vector<8x128xf32>
    %9 = arith.mulf %5, %5 : vector<8x128xf32>
    %10 = arith.addf %8, %9 : vector<8x128xf32>
    %cst = arith.constant 1.000000e-24 : f32
    %11 = vector.broadcast %cst : f32 to vector<8x128xf32>
    %12 = arith.maximumf %10, %11 : vector<8x128xf32>
    %13 = math.rsqrt %12 : vector<8x128xf32>
    %14 = arith.mulf %1, %13 : vector<8x128xf32>
    %15 = arith.mulf %3, %13 : vector<8x128xf32>
    %16 = arith.mulf %5, %13 : vector<8x128xf32>
    %cst_6 = arith.constant -0.488602519 : f32
    %17 = vector.broadcast %cst_6 : f32 to vector<8x128xf32>
    %18 = arith.mulf %17, %15 : vector<8x128xf32>
    %cst_7 = arith.constant 0.488602519 : f32
    %19 = vector.broadcast %cst_7 : f32 to vector<8x128xf32>
    %20 = arith.mulf %19, %16 : vector<8x128xf32>
    %cst_8 = arith.constant -0.488602519 : f32
    %21 = vector.broadcast %cst_8 : f32 to vector<8x128xf32>
    %22 = arith.mulf %21, %14 : vector<8x128xf32>
    %23 = arith.mulf %14, %14 : vector<8x128xf32>
    %24 = arith.mulf %15, %15 : vector<8x128xf32>
    %25 = arith.mulf %16, %16 : vector<8x128xf32>
    %26 = arith.mulf %14, %15 : vector<8x128xf32>
    %27 = arith.mulf %15, %16 : vector<8x128xf32>
    %28 = arith.mulf %14, %16 : vector<8x128xf32>
    %cst_9 = arith.constant 1.09254849 : f32
    %29 = vector.broadcast %cst_9 : f32 to vector<8x128xf32>
    %30 = arith.mulf %29, %26 : vector<8x128xf32>
    %cst_10 = arith.constant -1.09254849 : f32
    %31 = vector.broadcast %cst_10 : f32 to vector<8x128xf32>
    %32 = arith.mulf %31, %27 : vector<8x128xf32>
    %cst_11 = arith.constant 2.000000e+00 : f32
    %33 = vector.broadcast %cst_11 : f32 to vector<8x128xf32>
    %34 = arith.mulf %33, %25 : vector<8x128xf32>
    %35 = arith.subf %34, %23 : vector<8x128xf32>
    %36 = arith.subf %35, %24 : vector<8x128xf32>
    %cst_12 = arith.constant 0.31539157 : f32
    %37 = vector.broadcast %cst_12 : f32 to vector<8x128xf32>
    %38 = arith.mulf %37, %36 : vector<8x128xf32>
    %cst_13 = arith.constant -1.09254849 : f32
    %39 = vector.broadcast %cst_13 : f32 to vector<8x128xf32>
    %40 = arith.mulf %39, %28 : vector<8x128xf32>
    %41 = arith.subf %23, %24 : vector<8x128xf32>
    %cst_14 = arith.constant 0.546274245 : f32
    %42 = vector.broadcast %cst_14 : f32 to vector<8x128xf32>
    %43 = arith.mulf %42, %41 : vector<8x128xf32>
    %cst_15 = arith.constant -0.590043604 : f32
    %44 = vector.broadcast %cst_15 : f32 to vector<8x128xf32>
    %45 = arith.mulf %44, %15 : vector<8x128xf32>
    %cst_16 = arith.constant 3.000000e+00 : f32
    %46 = vector.broadcast %cst_16 : f32 to vector<8x128xf32>
    %47 = arith.mulf %46, %23 : vector<8x128xf32>
    %48 = arith.subf %47, %24 : vector<8x128xf32>
    %49 = arith.mulf %45, %48 : vector<8x128xf32>
    %cst_17 = arith.constant 2.89061141 : f32
    %50 = vector.broadcast %cst_17 : f32 to vector<8x128xf32>
    %51 = arith.mulf %50, %26 : vector<8x128xf32>
    %52 = arith.mulf %51, %16 : vector<8x128xf32>
    %cst_18 = arith.constant -0.457045794 : f32
    %53 = vector.broadcast %cst_18 : f32 to vector<8x128xf32>
    %54 = arith.mulf %53, %15 : vector<8x128xf32>
    %cst_19 = arith.constant 4.000000e+00 : f32
    %55 = vector.broadcast %cst_19 : f32 to vector<8x128xf32>
    %56 = arith.mulf %55, %25 : vector<8x128xf32>
    %57 = arith.subf %56, %23 : vector<8x128xf32>
    %58 = arith.subf %57, %24 : vector<8x128xf32>
    %59 = arith.mulf %54, %58 : vector<8x128xf32>
    %cst_20 = arith.constant 0.373176336 : f32
    %60 = vector.broadcast %cst_20 : f32 to vector<8x128xf32>
    %61 = arith.mulf %60, %16 : vector<8x128xf32>
    %cst_21 = arith.constant 2.000000e+00 : f32
    %62 = vector.broadcast %cst_21 : f32 to vector<8x128xf32>
    %63 = arith.mulf %62, %25 : vector<8x128xf32>
    %cst_22 = arith.constant 3.000000e+00 : f32
    %64 = vector.broadcast %cst_22 : f32 to vector<8x128xf32>
    %65 = arith.mulf %64, %23 : vector<8x128xf32>
    %66 = arith.subf %63, %65 : vector<8x128xf32>
    %cst_23 = arith.constant 3.000000e+00 : f32
    %67 = vector.broadcast %cst_23 : f32 to vector<8x128xf32>
    %68 = arith.mulf %67, %24 : vector<8x128xf32>
    %69 = arith.subf %66, %68 : vector<8x128xf32>
    %70 = arith.mulf %61, %69 : vector<8x128xf32>
    %cst_24 = arith.constant -0.457045794 : f32
    %71 = vector.broadcast %cst_24 : f32 to vector<8x128xf32>
    %72 = arith.mulf %71, %14 : vector<8x128xf32>
    %cst_25 = arith.constant 4.000000e+00 : f32
    %73 = vector.broadcast %cst_25 : f32 to vector<8x128xf32>
    %74 = arith.mulf %73, %25 : vector<8x128xf32>
    %75 = arith.subf %74, %23 : vector<8x128xf32>
    %76 = arith.subf %75, %24 : vector<8x128xf32>
    %77 = arith.mulf %72, %76 : vector<8x128xf32>
    %cst_26 = arith.constant 1.44530571 : f32
    %78 = vector.broadcast %cst_26 : f32 to vector<8x128xf32>
    %79 = arith.mulf %78, %16 : vector<8x128xf32>
    %80 = arith.subf %23, %24 : vector<8x128xf32>
    %81 = arith.mulf %79, %80 : vector<8x128xf32>
    %cst_27 = arith.constant -0.590043604 : f32
    %82 = vector.broadcast %cst_27 : f32 to vector<8x128xf32>
    %83 = arith.mulf %82, %14 : vector<8x128xf32>
    %cst_28 = arith.constant 3.000000e+00 : f32
    %84 = vector.broadcast %cst_28 : f32 to vector<8x128xf32>
    %85 = arith.mulf %84, %24 : vector<8x128xf32>
    %86 = arith.subf %23, %85 : vector<8x128xf32>
    %87 = arith.mulf %83, %86 : vector<8x128xf32>
    %cst_29 = arith.constant 2.50334287 : f32
    %88 = vector.broadcast %cst_29 : f32 to vector<8x128xf32>
    %89 = arith.mulf %88, %26 : vector<8x128xf32>
    %90 = arith.subf %23, %24 : vector<8x128xf32>
    %91 = arith.mulf %89, %90 : vector<8x128xf32>
    %cst_30 = arith.constant -1.77013075 : f32
    %92 = vector.broadcast %cst_30 : f32 to vector<8x128xf32>
    %93 = arith.mulf %92, %27 : vector<8x128xf32>
    %cst_31 = arith.constant 3.000000e+00 : f32
    %94 = vector.broadcast %cst_31 : f32 to vector<8x128xf32>
    %95 = arith.mulf %94, %23 : vector<8x128xf32>
    %96 = arith.subf %95, %24 : vector<8x128xf32>
    %97 = arith.mulf %93, %96 : vector<8x128xf32>
    %cst_32 = arith.constant 0.946174681 : f32
    %98 = vector.broadcast %cst_32 : f32 to vector<8x128xf32>
    %99 = arith.mulf %98, %26 : vector<8x128xf32>
    %cst_33 = arith.constant 7.000000e+00 : f32
    %100 = vector.broadcast %cst_33 : f32 to vector<8x128xf32>
    %101 = arith.mulf %100, %25 : vector<8x128xf32>
    %cst_34 = arith.constant 1.000000e+00 : f32
    %102 = vector.broadcast %cst_34 : f32 to vector<8x128xf32>
    %103 = arith.subf %101, %102 : vector<8x128xf32>
    %104 = arith.mulf %99, %103 : vector<8x128xf32>
    %cst_35 = arith.constant -0.669046521 : f32
    %105 = vector.broadcast %cst_35 : f32 to vector<8x128xf32>
    %106 = arith.mulf %105, %27 : vector<8x128xf32>
    %cst_36 = arith.constant 7.000000e+00 : f32
    %107 = vector.broadcast %cst_36 : f32 to vector<8x128xf32>
    %108 = arith.mulf %107, %25 : vector<8x128xf32>
    %cst_37 = arith.constant 3.000000e+00 : f32
    %109 = vector.broadcast %cst_37 : f32 to vector<8x128xf32>
    %110 = arith.subf %108, %109 : vector<8x128xf32>
    %111 = arith.mulf %106, %110 : vector<8x128xf32>
    %cst_38 = arith.constant 3.500000e+01 : f32
    %112 = vector.broadcast %cst_38 : f32 to vector<8x128xf32>
    %113 = arith.mulf %112, %25 : vector<8x128xf32>
    %cst_39 = arith.constant 3.000000e+01 : f32
    %114 = vector.broadcast %cst_39 : f32 to vector<8x128xf32>
    %115 = arith.subf %113, %114 : vector<8x128xf32>
    %116 = arith.mulf %25, %115 : vector<8x128xf32>
    %cst_40 = arith.constant 3.000000e+00 : f32
    %117 = vector.broadcast %cst_40 : f32 to vector<8x128xf32>
    %118 = arith.addf %116, %117 : vector<8x128xf32>
    %cst_41 = arith.constant 0.105785549 : f32
    %119 = vector.broadcast %cst_41 : f32 to vector<8x128xf32>
    %120 = arith.mulf %119, %118 : vector<8x128xf32>
    %cst_42 = arith.constant -0.669046521 : f32
    %121 = vector.broadcast %cst_42 : f32 to vector<8x128xf32>
    %122 = arith.mulf %121, %28 : vector<8x128xf32>
    %cst_43 = arith.constant 7.000000e+00 : f32
    %123 = vector.broadcast %cst_43 : f32 to vector<8x128xf32>
    %124 = arith.mulf %123, %25 : vector<8x128xf32>
    %cst_44 = arith.constant 3.000000e+00 : f32
    %125 = vector.broadcast %cst_44 : f32 to vector<8x128xf32>
    %126 = arith.subf %124, %125 : vector<8x128xf32>
    %127 = arith.mulf %122, %126 : vector<8x128xf32>
    %128 = arith.subf %23, %24 : vector<8x128xf32>
    %cst_45 = arith.constant 0.473087341 : f32
    %129 = vector.broadcast %cst_45 : f32 to vector<8x128xf32>
    %130 = arith.mulf %129, %128 : vector<8x128xf32>
    %cst_46 = arith.constant 7.000000e+00 : f32
    %131 = vector.broadcast %cst_46 : f32 to vector<8x128xf32>
    %132 = arith.mulf %131, %25 : vector<8x128xf32>
    %cst_47 = arith.constant 1.000000e+00 : f32
    %133 = vector.broadcast %cst_47 : f32 to vector<8x128xf32>
    %134 = arith.subf %132, %133 : vector<8x128xf32>
    %135 = arith.mulf %130, %134 : vector<8x128xf32>
    %cst_48 = arith.constant -1.77013075 : f32
    %136 = vector.broadcast %cst_48 : f32 to vector<8x128xf32>
    %137 = arith.mulf %136, %28 : vector<8x128xf32>
    %cst_49 = arith.constant 3.000000e+00 : f32
    %138 = vector.broadcast %cst_49 : f32 to vector<8x128xf32>
    %139 = arith.mulf %138, %24 : vector<8x128xf32>
    %140 = arith.subf %23, %139 : vector<8x128xf32>
    %141 = arith.mulf %137, %140 : vector<8x128xf32>
    %cst_50 = arith.constant 3.000000e+00 : f32
    %142 = vector.broadcast %cst_50 : f32 to vector<8x128xf32>
    %143 = arith.mulf %142, %24 : vector<8x128xf32>
    %144 = arith.subf %23, %143 : vector<8x128xf32>
    %145 = arith.mulf %23, %144 : vector<8x128xf32>
    %cst_51 = arith.constant 3.000000e+00 : f32
    %146 = vector.broadcast %cst_51 : f32 to vector<8x128xf32>
    %147 = arith.mulf %146, %23 : vector<8x128xf32>
    %148 = arith.subf %147, %24 : vector<8x128xf32>
    %149 = arith.mulf %24, %148 : vector<8x128xf32>
    %150 = arith.subf %145, %149 : vector<8x128xf32>
    %cst_52 = arith.constant 0.625835716 : f32
    %151 = vector.broadcast %cst_52 : f32 to vector<8x128xf32>
    %152 = arith.mulf %151, %150 : vector<8x128xf32>
    %c0_53 = arith.constant 0 : index
    %c0_54 = arith.constant 0 : index
    %c0_55 = arith.constant 0 : index
    %153 = vector.load %arg1[%c0_53, %c0_54, %c0_55] : memref<75x8x128xf32, #tpu.memory_space<vmem>>, vector<1x8x128xf32>
    %154 = vector.shape_cast %153 : vector<1x8x128xf32> to vector<8x128xf32>
    %cst_56 = arith.constant 0.282094806 : f32
    %155 = vector.broadcast %cst_56 : f32 to vector<8x128xf32>
    %156 = arith.mulf %155, %154 : vector<8x128xf32>
    %c1_57 = arith.constant 1 : index
    %c0_58 = arith.constant 0 : index
    %c0_59 = arith.constant 0 : index
    %157 = vector.load %arg1[%c1_57, %c0_58, %c0_59] : memref<75x8x128xf32, #tpu.memory_space<vmem>>, vector<1x8x128xf32>
    %158 = vector.shape_cast %157 : vector<1x8x128xf32> to vector<8x128xf32>
    %159 = arith.mulf %18, %158 : vector<8x128xf32>
    %c2_60 = arith.constant 2 : index
    %c0_61 = arith.constant 0 : index
    %c0_62 = arith.constant 0 : index
    %160 = vector.load %arg1[%c2_60, %c0_61, %c0_62] : memref<75x8x128xf32, #tpu.memory_space<vmem>>, vector<1x8x128xf32>
    %161 = vector.shape_cast %160 : vector<1x8x128xf32> to vector<8x128xf32>
    %162 = arith.mulf %20, %161 : vector<8x128xf32>
    %c3 = arith.constant 3 : index
    %c0_63 = arith.constant 0 : index
    %c0_64 = arith.constant 0 : index
    %163 = vector.load %arg1[%c3, %c0_63, %c0_64] : memref<75x8x128xf32, #tpu.memory_space<vmem>>, vector<1x8x128xf32>
    %164 = vector.shape_cast %163 : vector<1x8x128xf32> to vector<8x128xf32>
    %165 = arith.mulf %22, %164 : vector<8x128xf32>
    %c4 = arith.constant 4 : index
    %c0_65 = arith.constant 0 : index
    %c0_66 = arith.constant 0 : index
    %166 = vector.load %arg1[%c4, %c0_65, %c0_66] : memref<75x8x128xf32, #tpu.memory_space<vmem>>, vector<1x8x128xf32>
    %167 = vector.shape_cast %166 : vector<1x8x128xf32> to vector<8x128xf32>
    %168 = arith.mulf %30, %167 : vector<8x128xf32>
    %169 = arith.addf %156, %168 : vector<8x128xf32>
    %c5 = arith.constant 5 : index
    %c0_67 = arith.constant 0 : index
    %c0_68 = arith.constant 0 : index
    %170 = vector.load %arg1[%c5, %c0_67, %c0_68] : memref<75x8x128xf32, #tpu.memory_space<vmem>>, vector<1x8x128xf32>
    %171 = vector.shape_cast %170 : vector<1x8x128xf32> to vector<8x128xf32>
    %172 = arith.mulf %32, %171 : vector<8x128xf32>
    %173 = arith.addf %159, %172 : vector<8x128xf32>
    %c6 = arith.constant 6 : index
    %c0_69 = arith.constant 0 : index
    %c0_70 = arith.constant 0 : index
    %174 = vector.load %arg1[%c6, %c0_69, %c0_70] : memref<75x8x128xf32, #tpu.memory_space<vmem>>, vector<1x8x128xf32>
    %175 = vector.shape_cast %174 : vector<1x8x128xf32> to vector<8x128xf32>
    %176 = arith.mulf %38, %175 : vector<8x128xf32>
    %177 = arith.addf %162, %176 : vector<8x128xf32>
    %c7 = arith.constant 7 : index
    %c0_71 = arith.constant 0 : index
    %c0_72 = arith.constant 0 : index
    %178 = vector.load %arg1[%c7, %c0_71, %c0_72] : memref<75x8x128xf32, #tpu.memory_space<vmem>>, vector<1x8x128xf32>
    %179 = vector.shape_cast %178 : vector<1x8x128xf32> to vector<8x128xf32>
    %180 = arith.mulf %40, %179 : vector<8x128xf32>
    %181 = arith.addf %165, %180 : vector<8x128xf32>
    %c8 = arith.constant 8 : index
    %c0_73 = arith.constant 0 : index
    %c0_74 = arith.constant 0 : index
    %182 = vector.load %arg1[%c8, %c0_73, %c0_74] : memref<75x8x128xf32, #tpu.memory_space<vmem>>, vector<1x8x128xf32>
    %183 = vector.shape_cast %182 : vector<1x8x128xf32> to vector<8x128xf32>
    %184 = arith.mulf %43, %183 : vector<8x128xf32>
    %185 = arith.addf %169, %184 : vector<8x128xf32>
    %c9 = arith.constant 9 : index
    %c0_75 = arith.constant 0 : index
    %c0_76 = arith.constant 0 : index
    %186 = vector.load %arg1[%c9, %c0_75, %c0_76] : memref<75x8x128xf32, #tpu.memory_space<vmem>>, vector<1x8x128xf32>
    %187 = vector.shape_cast %186 : vector<1x8x128xf32> to vector<8x128xf32>
    %188 = arith.mulf %49, %187 : vector<8x128xf32>
    %189 = arith.addf %173, %188 : vector<8x128xf32>
    %c10 = arith.constant 10 : index
    %c0_77 = arith.constant 0 : index
    %c0_78 = arith.constant 0 : index
    %190 = vector.load %arg1[%c10, %c0_77, %c0_78] : memref<75x8x128xf32, #tpu.memory_space<vmem>>, vector<1x8x128xf32>
    %191 = vector.shape_cast %190 : vector<1x8x128xf32> to vector<8x128xf32>
    %192 = arith.mulf %52, %191 : vector<8x128xf32>
    %193 = arith.addf %177, %192 : vector<8x128xf32>
    %c11 = arith.constant 11 : index
    %c0_79 = arith.constant 0 : index
    %c0_80 = arith.constant 0 : index
    %194 = vector.load %arg1[%c11, %c0_79, %c0_80] : memref<75x8x128xf32, #tpu.memory_space<vmem>>, vector<1x8x128xf32>
    %195 = vector.shape_cast %194 : vector<1x8x128xf32> to vector<8x128xf32>
    %196 = arith.mulf %59, %195 : vector<8x128xf32>
    %197 = arith.addf %181, %196 : vector<8x128xf32>
    %c12 = arith.constant 12 : index
    %c0_81 = arith.constant 0 : index
    %c0_82 = arith.constant 0 : index
    %198 = vector.load %arg1[%c12, %c0_81, %c0_82] : memref<75x8x128xf32, #tpu.memory_space<vmem>>, vector<1x8x128xf32>
    %199 = vector.shape_cast %198 : vector<1x8x128xf32> to vector<8x128xf32>
    %200 = arith.mulf %70, %199 : vector<8x128xf32>
    %201 = arith.addf %185, %200 : vector<8x128xf32>
    %c13 = arith.constant 13 : index
    %c0_83 = arith.constant 0 : index
    %c0_84 = arith.constant 0 : index
    %202 = vector.load %arg1[%c13, %c0_83, %c0_84] : memref<75x8x128xf32, #tpu.memory_space<vmem>>, vector<1x8x128xf32>
    %203 = vector.shape_cast %202 : vector<1x8x128xf32> to vector<8x128xf32>
    %204 = arith.mulf %77, %203 : vector<8x128xf32>
    %205 = arith.addf %189, %204 : vector<8x128xf32>
    %c14 = arith.constant 14 : index
    %c0_85 = arith.constant 0 : index
    %c0_86 = arith.constant 0 : index
    %206 = vector.load %arg1[%c14, %c0_85, %c0_86] : memref<75x8x128xf32, #tpu.memory_space<vmem>>, vector<1x8x128xf32>
    %207 = vector.shape_cast %206 : vector<1x8x128xf32> to vector<8x128xf32>
    %208 = arith.mulf %81, %207 : vector<8x128xf32>
    %209 = arith.addf %193, %208 : vector<8x128xf32>
    %c15 = arith.constant 15 : index
    %c0_87 = arith.constant 0 : index
    %c0_88 = arith.constant 0 : index
    %210 = vector.load %arg1[%c15, %c0_87, %c0_88] : memref<75x8x128xf32, #tpu.memory_space<vmem>>, vector<1x8x128xf32>
    %211 = vector.shape_cast %210 : vector<1x8x128xf32> to vector<8x128xf32>
    %212 = arith.mulf %87, %211 : vector<8x128xf32>
    %213 = arith.addf %197, %212 : vector<8x128xf32>
    %c16 = arith.constant 16 : index
    %c0_89 = arith.constant 0 : index
    %c0_90 = arith.constant 0 : index
    %214 = vector.load %arg1[%c16, %c0_89, %c0_90] : memref<75x8x128xf32, #tpu.memory_space<vmem>>, vector<1x8x128xf32>
    %215 = vector.shape_cast %214 : vector<1x8x128xf32> to vector<8x128xf32>
    %216 = arith.mulf %91, %215 : vector<8x128xf32>
    %217 = arith.addf %201, %216 : vector<8x128xf32>
    %c17 = arith.constant 17 : index
    %c0_91 = arith.constant 0 : index
    %c0_92 = arith.constant 0 : index
    %218 = vector.load %arg1[%c17, %c0_91, %c0_92] : memref<75x8x128xf32, #tpu.memory_space<vmem>>, vector<1x8x128xf32>
    %219 = vector.shape_cast %218 : vector<1x8x128xf32> to vector<8x128xf32>
    %220 = arith.mulf %97, %219 : vector<8x128xf32>
    %221 = arith.addf %205, %220 : vector<8x128xf32>
    %c18 = arith.constant 18 : index
    %c0_93 = arith.constant 0 : index
    %c0_94 = arith.constant 0 : index
    %222 = vector.load %arg1[%c18, %c0_93, %c0_94] : memref<75x8x128xf32, #tpu.memory_space<vmem>>, vector<1x8x128xf32>
    %223 = vector.shape_cast %222 : vector<1x8x128xf32> to vector<8x128xf32>
    %224 = arith.mulf %104, %223 : vector<8x128xf32>
    %225 = arith.addf %209, %224 : vector<8x128xf32>
    %c19 = arith.constant 19 : index
    %c0_95 = arith.constant 0 : index
    %c0_96 = arith.constant 0 : index
    %226 = vector.load %arg1[%c19, %c0_95, %c0_96] : memref<75x8x128xf32, #tpu.memory_space<vmem>>, vector<1x8x128xf32>
    %227 = vector.shape_cast %226 : vector<1x8x128xf32> to vector<8x128xf32>
    %228 = arith.mulf %111, %227 : vector<8x128xf32>
    %229 = arith.addf %213, %228 : vector<8x128xf32>
    %c20 = arith.constant 20 : index
    %c0_97 = arith.constant 0 : index
    %c0_98 = arith.constant 0 : index
    %230 = vector.load %arg1[%c20, %c0_97, %c0_98] : memref<75x8x128xf32, #tpu.memory_space<vmem>>, vector<1x8x128xf32>
    %231 = vector.shape_cast %230 : vector<1x8x128xf32> to vector<8x128xf32>
    %232 = arith.mulf %120, %231 : vector<8x128xf32>
    %233 = arith.addf %217, %232 : vector<8x128xf32>
    %c21 = arith.constant 21 : index
    %c0_99 = arith.constant 0 : index
    %c0_100 = arith.constant 0 : index
    %234 = vector.load %arg1[%c21, %c0_99, %c0_100] : memref<75x8x128xf32, #tpu.memory_space<vmem>>, vector<1x8x128xf32>
    %235 = vector.shape_cast %234 : vector<1x8x128xf32> to vector<8x128xf32>
    %236 = arith.mulf %127, %235 : vector<8x128xf32>
    %237 = arith.addf %221, %236 : vector<8x128xf32>
    %c22 = arith.constant 22 : index
    %c0_101 = arith.constant 0 : index
    %c0_102 = arith.constant 0 : index
    %238 = vector.load %arg1[%c22, %c0_101, %c0_102] : memref<75x8x128xf32, #tpu.memory_space<vmem>>, vector<1x8x128xf32>
    %239 = vector.shape_cast %238 : vector<1x8x128xf32> to vector<8x128xf32>
    %240 = arith.mulf %135, %239 : vector<8x128xf32>
    %241 = arith.addf %225, %240 : vector<8x128xf32>
    %c23 = arith.constant 23 : index
    %c0_103 = arith.constant 0 : index
    %c0_104 = arith.constant 0 : index
    %242 = vector.load %arg1[%c23, %c0_103, %c0_104] : memref<75x8x128xf32, #tpu.memory_space<vmem>>, vector<1x8x128xf32>
    %243 = vector.shape_cast %242 : vector<1x8x128xf32> to vector<8x128xf32>
    %244 = arith.mulf %141, %243 : vector<8x128xf32>
    %245 = arith.addf %229, %244 : vector<8x128xf32>
    %c24 = arith.constant 24 : index
    %c0_105 = arith.constant 0 : index
    %c0_106 = arith.constant 0 : index
    %246 = vector.load %arg1[%c24, %c0_105, %c0_106] : memref<75x8x128xf32, #tpu.memory_space<vmem>>, vector<1x8x128xf32>
    %247 = vector.shape_cast %246 : vector<1x8x128xf32> to vector<8x128xf32>
    %248 = arith.mulf %152, %247 : vector<8x128xf32>
    %249 = arith.addf %233, %248 : vector<8x128xf32>
    %250 = arith.addf %249, %237 : vector<8x128xf32>
    %251 = arith.addf %250, %241 : vector<8x128xf32>
    %252 = arith.addf %251, %245 : vector<8x128xf32>
    %c0_107 = arith.constant 0 : index
    %c0_108 = arith.constant 0 : index
    %c0_109 = arith.constant 0 : index
    %253 = vector.load %arg3[%c0_107, %c0_108, %c0_109] : memref<3x8x128xf32, #tpu.memory_space<vmem>>, vector<1x8x128xf32>
    %254 = vector.shape_cast %253 : vector<1x8x128xf32> to vector<8x128xf32>
    %255 = vector.shape_cast %252 : vector<8x128xf32> to vector<1x8x128xf32>
    tpu.vector_store %arg3[%c0_107, %c0_108, %c0_109], %255 {strides = array<i32>} : memref<3x8x128xf32, #tpu.memory_space<vmem>>, vector<1x8x128xf32>,
    %c25 = arith.constant 25 : index
    %c0_110 = arith.constant 0 : index
    %c0_111 = arith.constant 0 : index
    %256 = vector.load %arg1[%c25, %c0_110, %c0_111] : memref<75x8x128xf32, #tpu.memory_space<vmem>>, vector<1x8x128xf32>
    %257 = vector.shape_cast %256 : vector<1x8x128xf32> to vector<8x128xf32>
    %cst_112 = arith.constant 0.282094806 : f32
    %258 = vector.broadcast %cst_112 : f32 to vector<8x128xf32>
    %259 = arith.mulf %258, %257 : vector<8x128xf32>
    %c26 = arith.constant 26 : index
    %c0_113 = arith.constant 0 : index
    %c0_114 = arith.constant 0 : index
    %260 = vector.load %arg1[%c26, %c0_113, %c0_114] : memref<75x8x128xf32, #tpu.memory_space<vmem>>, vector<1x8x128xf32>
    %261 = vector.shape_cast %260 : vector<1x8x128xf32> to vector<8x128xf32>
    %262 = arith.mulf %18, %261 : vector<8x128xf32>
    %c27 = arith.constant 27 : index
    %c0_115 = arith.constant 0 : index
    %c0_116 = arith.constant 0 : index
    %263 = vector.load %arg1[%c27, %c0_115, %c0_116] : memref<75x8x128xf32, #tpu.memory_space<vmem>>, vector<1x8x128xf32>
    %264 = vector.shape_cast %263 : vector<1x8x128xf32> to vector<8x128xf32>
    %265 = arith.mulf %20, %264 : vector<8x128xf32>
    %c28 = arith.constant 28 : index
    %c0_117 = arith.constant 0 : index
    %c0_118 = arith.constant 0 : index
    %266 = vector.load %arg1[%c28, %c0_117, %c0_118] : memref<75x8x128xf32, #tpu.memory_space<vmem>>, vector<1x8x128xf32>
    %267 = vector.shape_cast %266 : vector<1x8x128xf32> to vector<8x128xf32>
    %268 = arith.mulf %22, %267 : vector<8x128xf32>
    %c29 = arith.constant 29 : index
    %c0_119 = arith.constant 0 : index
    %c0_120 = arith.constant 0 : index
    %269 = vector.load %arg1[%c29, %c0_119, %c0_120] : memref<75x8x128xf32, #tpu.memory_space<vmem>>, vector<1x8x128xf32>
    %270 = vector.shape_cast %269 : vector<1x8x128xf32> to vector<8x128xf32>
    %271 = arith.mulf %30, %270 : vector<8x128xf32>
    %272 = arith.addf %259, %271 : vector<8x128xf32>
    %c30 = arith.constant 30 : index
    %c0_121 = arith.constant 0 : index
    %c0_122 = arith.constant 0 : index
    %273 = vector.load %arg1[%c30, %c0_121, %c0_122] : memref<75x8x128xf32, #tpu.memory_space<vmem>>, vector<1x8x128xf32>
    %274 = vector.shape_cast %273 : vector<1x8x128xf32> to vector<8x128xf32>
    %275 = arith.mulf %32, %274 : vector<8x128xf32>
    %276 = arith.addf %262, %275 : vector<8x128xf32>
    %c31 = arith.constant 31 : index
    %c0_123 = arith.constant 0 : index
    %c0_124 = arith.constant 0 : index
    %277 = vector.load %arg1[%c31, %c0_123, %c0_124] : memref<75x8x128xf32, #tpu.memory_space<vmem>>, vector<1x8x128xf32>
    %278 = vector.shape_cast %277 : vector<1x8x128xf32> to vector<8x128xf32>
    %279 = arith.mulf %38, %278 : vector<8x128xf32>
    %280 = arith.addf %265, %279 : vector<8x128xf32>
    %c32 = arith.constant 32 : index
    %c0_125 = arith.constant 0 : index
    %c0_126 = arith.constant 0 : index
    %281 = vector.load %arg1[%c32, %c0_125, %c0_126] : memref<75x8x128xf32, #tpu.memory_space<vmem>>, vector<1x8x128xf32>
    %282 = vector.shape_cast %281 : vector<1x8x128xf32> to vector<8x128xf32>
    %283 = arith.mulf %40, %282 : vector<8x128xf32>
    %284 = arith.addf %268, %283 : vector<8x128xf32>
    %c33 = arith.constant 33 : index
    %c0_127 = arith.constant 0 : index
    %c0_128 = arith.constant 0 : index
    %285 = vector.load %arg1[%c33, %c0_127, %c0_128] : memref<75x8x128xf32, #tpu.memory_space<vmem>>, vector<1x8x128xf32>
    %286 = vector.shape_cast %285 : vector<1x8x128xf32> to vector<8x128xf32>
    %287 = arith.mulf %43, %286 : vector<8x128xf32>
    %288 = arith.addf %272, %287 : vector<8x128xf32>
    %c34 = arith.constant 34 : index
    %c0_129 = arith.constant 0 : index
    %c0_130 = arith.constant 0 : index
    %289 = vector.load %arg1[%c34, %c0_129, %c0_130] : memref<75x8x128xf32, #tpu.memory_space<vmem>>, vector<1x8x128xf32>
    %290 = vector.shape_cast %289 : vector<1x8x128xf32> to vector<8x128xf32>
    %291 = arith.mulf %49, %290 : vector<8x128xf32>
    %292 = arith.addf %276, %291 : vector<8x128xf32>
    %c35 = arith.constant 35 : index
    %c0_131 = arith.constant 0 : index
    %c0_132 = arith.constant 0 : index
    %293 = vector.load %arg1[%c35, %c0_131, %c0_132] : memref<75x8x128xf32, #tpu.memory_space<vmem>>, vector<1x8x128xf32>
    %294 = vector.shape_cast %293 : vector<1x8x128xf32> to vector<8x128xf32>
    %295 = arith.mulf %52, %294 : vector<8x128xf32>
    %296 = arith.addf %280, %295 : vector<8x128xf32>
    %c36 = arith.constant 36 : index
    %c0_133 = arith.constant 0 : index
    %c0_134 = arith.constant 0 : index
    %297 = vector.load %arg1[%c36, %c0_133, %c0_134] : memref<75x8x128xf32, #tpu.memory_space<vmem>>, vector<1x8x128xf32>
    %298 = vector.shape_cast %297 : vector<1x8x128xf32> to vector<8x128xf32>
    %299 = arith.mulf %59, %298 : vector<8x128xf32>
    %300 = arith.addf %284, %299 : vector<8x128xf32>
    %c37 = arith.constant 37 : index
    %c0_135 = arith.constant 0 : index
    %c0_136 = arith.constant 0 : index
    %301 = vector.load %arg1[%c37, %c0_135, %c0_136] : memref<75x8x128xf32, #tpu.memory_space<vmem>>, vector<1x8x128xf32>
    %302 = vector.shape_cast %301 : vector<1x8x128xf32> to vector<8x128xf32>
    %303 = arith.mulf %70, %302 : vector<8x128xf32>
    %304 = arith.addf %288, %303 : vector<8x128xf32>
    %c38 = arith.constant 38 : index
    %c0_137 = arith.constant 0 : index
    %c0_138 = arith.constant 0 : index
    %305 = vector.load %arg1[%c38, %c0_137, %c0_138] : memref<75x8x128xf32, #tpu.memory_space<vmem>>, vector<1x8x128xf32>
    %306 = vector.shape_cast %305 : vector<1x8x128xf32> to vector<8x128xf32>
    %307 = arith.mulf %77, %306 : vector<8x128xf32>
    %308 = arith.addf %292, %307 : vector<8x128xf32>
    %c39 = arith.constant 39 : index
    %c0_139 = arith.constant 0 : index
    %c0_140 = arith.constant 0 : index
    %309 = vector.load %arg1[%c39, %c0_139, %c0_140] : memref<75x8x128xf32, #tpu.memory_space<vmem>>, vector<1x8x128xf32>
    %310 = vector.shape_cast %309 : vector<1x8x128xf32> to vector<8x128xf32>
    %311 = arith.mulf %81, %310 : vector<8x128xf32>
    %312 = arith.addf %296, %311 : vector<8x128xf32>
    %c40 = arith.constant 40 : index
    %c0_141 = arith.constant 0 : index
    %c0_142 = arith.constant 0 : index
    %313 = vector.load %arg1[%c40, %c0_141, %c0_142] : memref<75x8x128xf32, #tpu.memory_space<vmem>>, vector<1x8x128xf32>
    %314 = vector.shape_cast %313 : vector<1x8x128xf32> to vector<8x128xf32>
    %315 = arith.mulf %87, %314 : vector<8x128xf32>
    %316 = arith.addf %300, %315 : vector<8x128xf32>
    %c41 = arith.constant 41 : index
    %c0_143 = arith.constant 0 : index
    %c0_144 = arith.constant 0 : index
    %317 = vector.load %arg1[%c41, %c0_143, %c0_144] : memref<75x8x128xf32, #tpu.memory_space<vmem>>, vector<1x8x128xf32>
    %318 = vector.shape_cast %317 : vector<1x8x128xf32> to vector<8x128xf32>
    %319 = arith.mulf %91, %318 : vector<8x128xf32>
    %320 = arith.addf %304, %319 : vector<8x128xf32>
    %c42 = arith.constant 42 : index
    %c0_145 = arith.constant 0 : index
    %c0_146 = arith.constant 0 : index
    %321 = vector.load %arg1[%c42, %c0_145, %c0_146] : memref<75x8x128xf32, #tpu.memory_space<vmem>>, vector<1x8x128xf32>
    %322 = vector.shape_cast %321 : vector<1x8x128xf32> to vector<8x128xf32>
    %323 = arith.mulf %97, %322 : vector<8x128xf32>
    %324 = arith.addf %308, %323 : vector<8x128xf32>
    %c43 = arith.constant 43 : index
    %c0_147 = arith.constant 0 : index
    %c0_148 = arith.constant 0 : index
    %325 = vector.load %arg1[%c43, %c0_147, %c0_148] : memref<75x8x128xf32, #tpu.memory_space<vmem>>, vector<1x8x128xf32>
    %326 = vector.shape_cast %325 : vector<1x8x128xf32> to vector<8x128xf32>
    %327 = arith.mulf %104, %326 : vector<8x128xf32>
    %328 = arith.addf %312, %327 : vector<8x128xf32>
    %c44 = arith.constant 44 : index
    %c0_149 = arith.constant 0 : index
    %c0_150 = arith.constant 0 : index
    %329 = vector.load %arg1[%c44, %c0_149, %c0_150] : memref<75x8x128xf32, #tpu.memory_space<vmem>>, vector<1x8x128xf32>
    %330 = vector.shape_cast %329 : vector<1x8x128xf32> to vector<8x128xf32>
    %331 = arith.mulf %111, %330 : vector<8x128xf32>
    %332 = arith.addf %316, %331 : vector<8x128xf32>
    %c45 = arith.constant 45 : index
    %c0_151 = arith.constant 0 : index
    %c0_152 = arith.constant 0 : index
    %333 = vector.load %arg1[%c45, %c0_151, %c0_152] : memref<75x8x128xf32, #tpu.memory_space<vmem>>, vector<1x8x128xf32>
    %334 = vector.shape_cast %333 : vector<1x8x128xf32> to vector<8x128xf32>
    %335 = arith.mulf %120, %334 : vector<8x128xf32>
    %336 = arith.addf %320, %335 : vector<8x128xf32>
    %c46 = arith.constant 46 : index
    %c0_153 = arith.constant 0 : index
    %c0_154 = arith.constant 0 : index
    %337 = vector.load %arg1[%c46, %c0_153, %c0_154] : memref<75x8x128xf32, #tpu.memory_space<vmem>>, vector<1x8x128xf32>
    %338 = vector.shape_cast %337 : vector<1x8x128xf32> to vector<8x128xf32>
    %339 = arith.mulf %127, %338 : vector<8x128xf32>
    %340 = arith.addf %324, %339 : vector<8x128xf32>
    %c47 = arith.constant 47 : index
    %c0_155 = arith.constant 0 : index
    %c0_156 = arith.constant 0 : index
    %341 = vector.load %arg1[%c47, %c0_155, %c0_156] : memref<75x8x128xf32, #tpu.memory_space<vmem>>, vector<1x8x128xf32>
    %342 = vector.shape_cast %341 : vector<1x8x128xf32> to vector<8x128xf32>
    %343 = arith.mulf %135, %342 : vector<8x128xf32>
    %344 = arith.addf %328, %343 : vector<8x128xf32>
    %c48 = arith.constant 48 : index
    %c0_157 = arith.constant 0 : index
    %c0_158 = arith.constant 0 : index
    %345 = vector.load %arg1[%c48, %c0_157, %c0_158] : memref<75x8x128xf32, #tpu.memory_space<vmem>>, vector<1x8x128xf32>
    %346 = vector.shape_cast %345 : vector<1x8x128xf32> to vector<8x128xf32>
    %347 = arith.mulf %141, %346 : vector<8x128xf32>
    %348 = arith.addf %332, %347 : vector<8x128xf32>
    %c49 = arith.constant 49 : index
    %c0_159 = arith.constant 0 : index
    %c0_160 = arith.constant 0 : index
    %349 = vector.load %arg1[%c49, %c0_159, %c0_160] : memref<75x8x128xf32, #tpu.memory_space<vmem>>, vector<1x8x128xf32>
    %350 = vector.shape_cast %349 : vector<1x8x128xf32> to vector<8x128xf32>
    %351 = arith.mulf %152, %350 : vector<8x128xf32>
    %352 = arith.addf %336, %351 : vector<8x128xf32>
    %353 = arith.addf %352, %340 : vector<8x128xf32>
    %354 = arith.addf %353, %344 : vector<8x128xf32>
    %355 = arith.addf %354, %348 : vector<8x128xf32>
    %c1_161 = arith.constant 1 : index
    %c0_162 = arith.constant 0 : index
    %c0_163 = arith.constant 0 : index
    %356 = vector.load %arg3[%c1_161, %c0_162, %c0_163] : memref<3x8x128xf32, #tpu.memory_space<vmem>>, vector<1x8x128xf32>
    %357 = vector.shape_cast %356 : vector<1x8x128xf32> to vector<8x128xf32>
    %358 = vector.shape_cast %355 : vector<8x128xf32> to vector<1x8x128xf32>
    tpu.vector_store %arg3[%c1_161, %c0_162, %c0_163], %358 {strides = array<i32>} : memref<3x8x128xf32, #tpu.memory_space<vmem>>, vector<1x8x128xf32>,
    %c50 = arith.constant 50 : index
    %c0_164 = arith.constant 0 : index
    %c0_165 = arith.constant 0 : index
    %359 = vector.load %arg1[%c50, %c0_164, %c0_165] : memref<75x8x128xf32, #tpu.memory_space<vmem>>, vector<1x8x128xf32>
    %360 = vector.shape_cast %359 : vector<1x8x128xf32> to vector<8x128xf32>
    %cst_166 = arith.constant 0.282094806 : f32
    %361 = vector.broadcast %cst_166 : f32 to vector<8x128xf32>
    %362 = arith.mulf %361, %360 : vector<8x128xf32>
    %c51 = arith.constant 51 : index
    %c0_167 = arith.constant 0 : index
    %c0_168 = arith.constant 0 : index
    %363 = vector.load %arg1[%c51, %c0_167, %c0_168] : memref<75x8x128xf32, #tpu.memory_space<vmem>>, vector<1x8x128xf32>
    %364 = vector.shape_cast %363 : vector<1x8x128xf32> to vector<8x128xf32>
    %365 = arith.mulf %18, %364 : vector<8x128xf32>
    %c52 = arith.constant 52 : index
    %c0_169 = arith.constant 0 : index
    %c0_170 = arith.constant 0 : index
    %366 = vector.load %arg1[%c52, %c0_169, %c0_170] : memref<75x8x128xf32, #tpu.memory_space<vmem>>, vector<1x8x128xf32>
    %367 = vector.shape_cast %366 : vector<1x8x128xf32> to vector<8x128xf32>
    %368 = arith.mulf %20, %367 : vector<8x128xf32>
    %c53 = arith.constant 53 : index
    %c0_171 = arith.constant 0 : index
    %c0_172 = arith.constant 0 : index
    %369 = vector.load %arg1[%c53, %c0_171, %c0_172] : memref<75x8x128xf32, #tpu.memory_space<vmem>>, vector<1x8x128xf32>
    %370 = vector.shape_cast %369 : vector<1x8x128xf32> to vector<8x128xf32>
    %371 = arith.mulf %22, %370 : vector<8x128xf32>
    %c54 = arith.constant 54 : index
    %c0_173 = arith.constant 0 : index
    %c0_174 = arith.constant 0 : index
    %372 = vector.load %arg1[%c54, %c0_173, %c0_174] : memref<75x8x128xf32, #tpu.memory_space<vmem>>, vector<1x8x128xf32>
    %373 = vector.shape_cast %372 : vector<1x8x128xf32> to vector<8x128xf32>
    %374 = arith.mulf %30, %373 : vector<8x128xf32>
    %375 = arith.addf %362, %374 : vector<8x128xf32>
    %c55 = arith.constant 55 : index
    %c0_175 = arith.constant 0 : index
    %c0_176 = arith.constant 0 : index
    %376 = vector.load %arg1[%c55, %c0_175, %c0_176] : memref<75x8x128xf32, #tpu.memory_space<vmem>>, vector<1x8x128xf32>
    %377 = vector.shape_cast %376 : vector<1x8x128xf32> to vector<8x128xf32>
    %378 = arith.mulf %32, %377 : vector<8x128xf32>
    %379 = arith.addf %365, %378 : vector<8x128xf32>
    %c56 = arith.constant 56 : index
    %c0_177 = arith.constant 0 : index
    %c0_178 = arith.constant 0 : index
    %380 = vector.load %arg1[%c56, %c0_177, %c0_178] : memref<75x8x128xf32, #tpu.memory_space<vmem>>, vector<1x8x128xf32>
    %381 = vector.shape_cast %380 : vector<1x8x128xf32> to vector<8x128xf32>
    %382 = arith.mulf %38, %381 : vector<8x128xf32>
    %383 = arith.addf %368, %382 : vector<8x128xf32>
    %c57 = arith.constant 57 : index
    %c0_179 = arith.constant 0 : index
    %c0_180 = arith.constant 0 : index
    %384 = vector.load %arg1[%c57, %c0_179, %c0_180] : memref<75x8x128xf32, #tpu.memory_space<vmem>>, vector<1x8x128xf32>
    %385 = vector.shape_cast %384 : vector<1x8x128xf32> to vector<8x128xf32>
    %386 = arith.mulf %40, %385 : vector<8x128xf32>
    %387 = arith.addf %371, %386 : vector<8x128xf32>
    %c58 = arith.constant 58 : index
    %c0_181 = arith.constant 0 : index
    %c0_182 = arith.constant 0 : index
    %388 = vector.load %arg1[%c58, %c0_181, %c0_182] : memref<75x8x128xf32, #tpu.memory_space<vmem>>, vector<1x8x128xf32>
    %389 = vector.shape_cast %388 : vector<1x8x128xf32> to vector<8x128xf32>
    %390 = arith.mulf %43, %389 : vector<8x128xf32>
    %391 = arith.addf %375, %390 : vector<8x128xf32>
    %c59 = arith.constant 59 : index
    %c0_183 = arith.constant 0 : index
    %c0_184 = arith.constant 0 : index
    %392 = vector.load %arg1[%c59, %c0_183, %c0_184] : memref<75x8x128xf32, #tpu.memory_space<vmem>>, vector<1x8x128xf32>
    %393 = vector.shape_cast %392 : vector<1x8x128xf32> to vector<8x128xf32>
    %394 = arith.mulf %49, %393 : vector<8x128xf32>
    %395 = arith.addf %379, %394 : vector<8x128xf32>
    %c60 = arith.constant 60 : index
    %c0_185 = arith.constant 0 : index
    %c0_186 = arith.constant 0 : index
    %396 = vector.load %arg1[%c60, %c0_185, %c0_186] : memref<75x8x128xf32, #tpu.memory_space<vmem>>, vector<1x8x128xf32>
    %397 = vector.shape_cast %396 : vector<1x8x128xf32> to vector<8x128xf32>
    %398 = arith.mulf %52, %397 : vector<8x128xf32>
    %399 = arith.addf %383, %398 : vector<8x128xf32>
    %c61 = arith.constant 61 : index
    %c0_187 = arith.constant 0 : index
    %c0_188 = arith.constant 0 : index
    %400 = vector.load %arg1[%c61, %c0_187, %c0_188] : memref<75x8x128xf32, #tpu.memory_space<vmem>>, vector<1x8x128xf32>
    %401 = vector.shape_cast %400 : vector<1x8x128xf32> to vector<8x128xf32>
    %402 = arith.mulf %59, %401 : vector<8x128xf32>
    %403 = arith.addf %387, %402 : vector<8x128xf32>
    %c62 = arith.constant 62 : index
    %c0_189 = arith.constant 0 : index
    %c0_190 = arith.constant 0 : index
    %404 = vector.load %arg1[%c62, %c0_189, %c0_190] : memref<75x8x128xf32, #tpu.memory_space<vmem>>, vector<1x8x128xf32>
    %405 = vector.shape_cast %404 : vector<1x8x128xf32> to vector<8x128xf32>
    %406 = arith.mulf %70, %405 : vector<8x128xf32>
    %407 = arith.addf %391, %406 : vector<8x128xf32>
    %c63 = arith.constant 63 : index
    %c0_191 = arith.constant 0 : index
    %c0_192 = arith.constant 0 : index
    %408 = vector.load %arg1[%c63, %c0_191, %c0_192] : memref<75x8x128xf32, #tpu.memory_space<vmem>>, vector<1x8x128xf32>
    %409 = vector.shape_cast %408 : vector<1x8x128xf32> to vector<8x128xf32>
    %410 = arith.mulf %77, %409 : vector<8x128xf32>
    %411 = arith.addf %395, %410 : vector<8x128xf32>
    %c64 = arith.constant 64 : index
    %c0_193 = arith.constant 0 : index
    %c0_194 = arith.constant 0 : index
    %412 = vector.load %arg1[%c64, %c0_193, %c0_194] : memref<75x8x128xf32, #tpu.memory_space<vmem>>, vector<1x8x128xf32>
    %413 = vector.shape_cast %412 : vector<1x8x128xf32> to vector<8x128xf32>
    %414 = arith.mulf %81, %413 : vector<8x128xf32>
    %415 = arith.addf %399, %414 : vector<8x128xf32>
    %c65 = arith.constant 65 : index
    %c0_195 = arith.constant 0 : index
    %c0_196 = arith.constant 0 : index
    %416 = vector.load %arg1[%c65, %c0_195, %c0_196] : memref<75x8x128xf32, #tpu.memory_space<vmem>>, vector<1x8x128xf32>
    %417 = vector.shape_cast %416 : vector<1x8x128xf32> to vector<8x128xf32>
    %418 = arith.mulf %87, %417 : vector<8x128xf32>
    %419 = arith.addf %403, %418 : vector<8x128xf32>
    %c66 = arith.constant 66 : index
    %c0_197 = arith.constant 0 : index
    %c0_198 = arith.constant 0 : index
    %420 = vector.load %arg1[%c66, %c0_197, %c0_198] : memref<75x8x128xf32, #tpu.memory_space<vmem>>, vector<1x8x128xf32>
    %421 = vector.shape_cast %420 : vector<1x8x128xf32> to vector<8x128xf32>
    %422 = arith.mulf %91, %421 : vector<8x128xf32>
    %423 = arith.addf %407, %422 : vector<8x128xf32>
    %c67 = arith.constant 67 : index
    %c0_199 = arith.constant 0 : index
    %c0_200 = arith.constant 0 : index
    %424 = vector.load %arg1[%c67, %c0_199, %c0_200] : memref<75x8x128xf32, #tpu.memory_space<vmem>>, vector<1x8x128xf32>
    %425 = vector.shape_cast %424 : vector<1x8x128xf32> to vector<8x128xf32>
    %426 = arith.mulf %97, %425 : vector<8x128xf32>
    %427 = arith.addf %411, %426 : vector<8x128xf32>
    %c68 = arith.constant 68 : index
    %c0_201 = arith.constant 0 : index
    %c0_202 = arith.constant 0 : index
    %428 = vector.load %arg1[%c68, %c0_201, %c0_202] : memref<75x8x128xf32, #tpu.memory_space<vmem>>, vector<1x8x128xf32>
    %429 = vector.shape_cast %428 : vector<1x8x128xf32> to vector<8x128xf32>
    %430 = arith.mulf %104, %429 : vector<8x128xf32>
    %431 = arith.addf %415, %430 : vector<8x128xf32>
    %c69 = arith.constant 69 : index
    %c0_203 = arith.constant 0 : index
    %c0_204 = arith.constant 0 : index
    %432 = vector.load %arg1[%c69, %c0_203, %c0_204] : memref<75x8x128xf32, #tpu.memory_space<vmem>>, vector<1x8x128xf32>
    %433 = vector.shape_cast %432 : vector<1x8x128xf32> to vector<8x128xf32>
    %434 = arith.mulf %111, %433 : vector<8x128xf32>
    %435 = arith.addf %419, %434 : vector<8x128xf32>
    %c70 = arith.constant 70 : index
    %c0_205 = arith.constant 0 : index
    %c0_206 = arith.constant 0 : index
    %436 = vector.load %arg1[%c70, %c0_205, %c0_206] : memref<75x8x128xf32, #tpu.memory_space<vmem>>, vector<1x8x128xf32>
    %437 = vector.shape_cast %436 : vector<1x8x128xf32> to vector<8x128xf32>
    %438 = arith.mulf %120, %437 : vector<8x128xf32>
    %439 = arith.addf %423, %438 : vector<8x128xf32>
    %c71 = arith.constant 71 : index
    %c0_207 = arith.constant 0 : index
    %c0_208 = arith.constant 0 : index
    %440 = vector.load %arg1[%c71, %c0_207, %c0_208] : memref<75x8x128xf32, #tpu.memory_space<vmem>>, vector<1x8x128xf32>
    %441 = vector.shape_cast %440 : vector<1x8x128xf32> to vector<8x128xf32>
    %442 = arith.mulf %127, %441 : vector<8x128xf32>
    %443 = arith.addf %427, %442 : vector<8x128xf32>
    %c72 = arith.constant 72 : index
    %c0_209 = arith.constant 0 : index
    %c0_210 = arith.constant 0 : index
    %444 = vector.load %arg1[%c72, %c0_209, %c0_210] : memref<75x8x128xf32, #tpu.memory_space<vmem>>, vector<1x8x128xf32>
    %445 = vector.shape_cast %444 : vector<1x8x128xf32> to vector<8x128xf32>
    %446 = arith.mulf %135, %445 : vector<8x128xf32>
    %447 = arith.addf %431, %446 : vector<8x128xf32>
    %c73 = arith.constant 73 : index
    %c0_211 = arith.constant 0 : index
    %c0_212 = arith.constant 0 : index
    %448 = vector.load %arg1[%c73, %c0_211, %c0_212] : memref<75x8x128xf32, #tpu.memory_space<vmem>>, vector<1x8x128xf32>
    %449 = vector.shape_cast %448 : vector<1x8x128xf32> to vector<8x128xf32>
    %450 = arith.mulf %141, %449 : vector<8x128xf32>
    %451 = arith.addf %435, %450 : vector<8x128xf32>
    %c74 = arith.constant 74 : index
    %c0_213 = arith.constant 0 : index
    %c0_214 = arith.constant 0 : index
    %452 = vector.load %arg1[%c74, %c0_213, %c0_214] : memref<75x8x128xf32, #tpu.memory_space<vmem>>, vector<1x8x128xf32>
    %453 = vector.shape_cast %452 : vector<1x8x128xf32> to vector<8x128xf32>
    %454 = arith.mulf %152, %453 : vector<8x128xf32>
    %455 = arith.addf %439, %454 : vector<8x128xf32>
    %456 = arith.addf %455, %443 : vector<8x128xf32>
    %457 = arith.addf %456, %447 : vector<8x128xf32>
    %458 = arith.addf %457, %451 : vector<8x128xf32>
    %c2_215 = arith.constant 2 : index
    %c0_216 = arith.constant 0 : index
    %c0_217 = arith.constant 0 : index
    %459 = vector.load %arg3[%c2_215, %c0_216, %c0_217] : memref<3x8x128xf32, #tpu.memory_space<vmem>>, vector<1x8x128xf32>
    %460 = vector.shape_cast %459 : vector<1x8x128xf32> to vector<8x128xf32>
    %461 = vector.shape_cast %458 : vector<8x128xf32> to vector<1x8x128xf32>
    tpu.vector_store %arg3[%c2_215, %c0_216, %c0_217], %461 {strides = array<i32>} : memref<3x8x128xf32, #tpu.memory_space<vmem>>, vector<1x8x128xf32>,
    return
  }
  func.func @transform_0(%arg0: i32) -> (i32, i32, i32) {
    %c0_i32 = arith.constant 0 : i32
    %c0_i32_0 = arith.constant 0 : i32
    %c0_i32_1 = arith.constant 0 : i32
    return %c0_i32, %arg0, %c0_i32_0 : i32, i32, i32
  }
  func.func @transform_1(%arg0: i32) -> (i32, i32, i32) {
    %c0_i32 = arith.constant 0 : i32
    %c0_i32_0 = arith.constant 0 : i32
    %c0_i32_1 = arith.constant 0 : i32
    return %c0_i32, %arg0, %c0_i32_0 : i32, i32, i32
  }
  func.func @transform_2(%arg0: i32) -> (i32, i32, i32) {
    %c0_i32 = arith.constant 0 : i32
    %c0_i32_0 = arith.constant 0 : i32
    %c0_i32_1 = arith.constant 0 : i32
    return %c0_i32, %arg0, %c0_i32_0 : i32, i32, i32
  }
}

</mosaic_0001>

<llo_original>
// kernel: tpu_custom_call.1
$region0: #{tpu_custom_call.1}
  #allocation0 [shape = 'u32[]', space=smem, size = 0x4, offset = 0x4, fixed_abs, tag = 'smem constant byte address 0x4 - core index']
  #allocation1 [shape = 'u32[144,128]{1,0:T(1,128)}', space=vmem, size = 0x12000, scoped, tag = 'internal scratch']
  %s0 = inlined_call_operand.hbm [shape: f32[75,16,128], index: 0, kind: input, shape index: {}]
  %s1 = inlined_call_operand.hbm [shape: f32[3,16,128], index: 1, kind: input, shape index: {}]
  %s2 = inlined_call_operand.hbm [shape: f32[3,16,128], index: 2, kind: output, shape index: {}]
  %s3 = sld [smem:[#allocation0]]
  $region49: #{tpu_custom_call.1} parent=0
    _
  %s5 = ssub.s32 1, %s3
  %s6 = scalar_select 0, %s5, %s3
  $region1: #{tpu_custom_call.1} parent=0
    #allocation2 [shape = 'u8[614400]{0}', space=vmem, size = 0x96000, scoped, tag = 'input window, operand 0']
    #allocation3 [shape = 's32[2]{0}', space=sflag, size = 0x8, scoped, tag = 'scoped memory for tpu_custom_call.1']
    #allocation4 [shape = 's32[2]{0}', space=sflag, size = 0x8, scoped, tag = 'scoped memory for tpu_custom_call.1']
    #allocation5 [shape = 'u8[24576]{0}', space=vmem, size = 0x6000, scoped, tag = 'input window, operand 1']
    #allocation6 [shape = 's32[2]{0}', space=sflag, size = 0x8, scoped, tag = 'scoped memory for tpu_custom_call.1']
    #allocation7 [shape = 'u8[24576]{0}', space=vmem, size = 0x6000, scoped, tag = 'output window, operand 0']
    %7 = vsyncpa [#allocation3], 0
    %s8 = scalar_lea.sflag [#allocation3], 1
    %9 = vsyncpa %s8, 0
    %10 = vsyncpa [#allocation6], 0
    %s11 = scalar_lea.sflag [#allocation6], 1
    %12 = vsyncpa %s11, 0
    %13 = vsyncpa [#allocation4], 0
    %s14 = scalar_lea.sflag [#allocation4], 1
    %15 = vsyncpa %s14, 0
    loop: start=0, step=1, limit=4
    $region2: #{tpu_custom_call.1} parent=1 // loop_pre_header
      _
    $region3: #{tpu_custom_call.1} parent=1 // loop_header
      %s17 = sphi 0, %s21
      %p18 = scmp.ge.s32.totalorder %s17, 4
      %s27 = sphi 0, %s29
      %s30 = sphi 0, %s27
      %s31 = sphi 0, %s30
      %s47 = sphi 0, %s31
      %s53 = sphi 0, %s55
      %s56 = sphi 0, %s53
      %s57 = sphi 0, %s56
      %s73 = sphi 0, %s57
      %s79 = sphi 0, %s81
      %s82 = sphi 0, %s79
      %s83 = sphi 0, %s82
      %s99 = sphi 0, %s83
    $region4: #{tpu_custom_call.1} parent=1 // loop_header_branch
      %20 = sbr.rel (%p18) target = $region8
    $region5: #{tpu_custom_call.1} parent=1 // loop_body
      %s22 = ssub.s32 %s17, 1
      %s23 = ssub.s32 %s17, 2
      %s24 = sadd.s32 %s17, 1
      %s25 = ssub.s32 %s17, %s24
      %p26 = scmp.eq.s32.totalorder %s25, 0
      %s28 = sadd.s32 %s27, 1
      %s29 = scalar_select %p26, %s27, %s28
      %p32 = pneg %p26
      %p33 = scmp.eq.s32.totalorder %s17, 1
      %p34 = por %p32, %p33
      %p35 = scmp.ne.s32.totalorder %s27, %s30
      %p36 = scmp.eq.s32.totalorder %s17, 0
      %p37 = por %p35, %p36
      %p38 = scmp.ne.s32.totalorder %s27, %s30
      %p39 = scmp.eq.s32.totalorder %s22, 1
      %p40 = por %p38, %p39
      %p41 = scmp.ne.s32.totalorder %s30, %s31
      %p42 = scmp.eq.s32.totalorder %s22, 0
      %p43 = por %p41, %p42
      %p44 = scmp.ne.s32.totalorder %s30, %s31
      %p45 = scmp.eq.s32.totalorder %s23, 1
      %p46 = por %p44, %p45
      %p48 = scmp.ne.s32.totalorder %s31, %s47
      %p49 = scmp.eq.s32.totalorder %s23, 0
      %p50 = por %p48, %p49
      %s51 = ssub.s32 %s17, %s24
      %p52 = scmp.eq.s32.totalorder %s51, 0
      %s54 = sadd.s32 %s53, 1
      %s55 = scalar_select %p52, %s53, %s54
      %p58 = pneg %p52
      %p59 = scmp.eq.s32.totalorder %s17, 1
      %p60 = por %p58, %p59
      %p61 = scmp.ne.s32.totalorder %s53, %s56
      %p62 = scmp.eq.s32.totalorder %s17, 0
      %p63 = por %p61, %p62
      %p64 = scmp.ne.s32.totalorder %s53, %s56
      %p65 = scmp.eq.s32.totalorder %s22, 1
      %p66 = por %p64, %p65
      %p67 = scmp.ne.s32.totalorder %s56, %s57
      %p68 = scmp.eq.s32.totalorder %s22, 0
      %p69 = por %p67, %p68
      %p70 = scmp.ne.s32.totalorder %s56, %s57
      %p71 = scmp.eq.s32.totalorder %s23, 1
      %p72 = por %p70, %p71
      %p74 = scmp.ne.s32.totalorder %s57, %s73
      %p75 = scmp.eq.s32.totalorder %s23, 0
      %p76 = por %p74, %p75
      %s77 = ssub.s32 %s17, %s24
      %p78 = scmp.eq.s32.totalorder %s77, 0
      %s80 = sadd.s32 %s79, 1
      %s81 = scalar_select %p78, %s79, %s80
      %p84 = pneg %p78
      %p85 = scmp.eq.s32.totalorder %s17, 1
      %p86 = por %p84, %p85
      %p87 = scmp.ne.s32.totalorder %s79, %s82
      %p88 = scmp.eq.s32.totalorder %s17, 0
      %p89 = por %p87, %p88
      %p90 = scmp.ne.s32.totalorder %s79, %s82
      %p91 = scmp.eq.s32.totalorder %s22, 1
      %p92 = por %p90, %p91
      %p93 = scmp.ne.s32.totalorder %s82, %s83
      %p94 = scmp.eq.s32.totalorder %s22, 0
      %p95 = por %p93, %p94
      %p96 = scmp.ne.s32.totalorder %s82, %s83
      %p97 = scmp.eq.s32.totalorder %s23, 1
      %p98 = por %p96, %p97
      %p100 = scmp.ne.s32.totalorder %s83, %s99
      %p101 = scmp.eq.s32.totalorder %s23, 0
      %p102 = por %p100, %p101
      %p103 = scmp.le.s32.totalorder 1, %s17
      %p104 = scmp.lt.s32.totalorder %s17, 3
      %p105 = pnand %p103, %p104
      %p106 = pneg %p105
      // Predicated region
      $region9: #{tpu_custom_call.1} parent=5 // pred_check
        _
      $region10: #{tpu_custom_call.1} parent=5 // pred_check_branch
        %108 = sbr.rel (%p105) target = $region12
      $region11: #{tpu_custom_call.1} parent=5 // pred_region
        %s109 = ssub.s32 %s17, 1
      $region12: #{tpu_custom_call.1} parent=5 // pred_fallthru
        _
      %p110 = scmp.lt.s32.totalorder %s17, 2
      // Predicated region
      $region13: #{tpu_custom_call.1} parent=5 // pred_check
        %p111 = pneg %p110
      $region14: #{tpu_custom_call.1} parent=5 // pred_check_branch
        %113 = sbr.rel (%p111) target = $region16
      $region15: #{tpu_custom_call.1} parent=5 // pred_region
        // Predicated region
        $region17: #{tpu_custom_call.1} parent=15 // pred_check
          %p114 = pneg %p37
        $region18: #{tpu_custom_call.1} parent=15 // pred_check_branch
          %116 = sbr.rel (%p114) target = $region20
        $region19: #{tpu_custom_call.1} parent=15 // pred_region
          %s117 = sand.u32 %s27, 1
          %s118 = scalar_lea.sflag [#allocation3], %s117
          %s119 = sand.u32 %s27, 1
          %s120 = smul.addr %s119, 600
          %s121 = scalar_lea.vmem [#allocation2], %s120
          %s123 = ssub.s32 9600, 9600
          %124 = vsyncadd %s118, %s123
          %s125 = smul.addr %s17, 128
          %s126 = scalar_lea.hbm %s0, %s125
          %s127 = sshll.u32 %s121, 4
          %s128 = int_to_ptr.vmem [resolvable:$true] %s127
          %133 = dma.hbm_to_vmem [thread:$0]  %s126, 9600, %s128, %s118, 256, 128, 8
        $region20: #{tpu_custom_call.1} parent=15 // pred_fallthru
          _
        // Predicated region
        $region21: #{tpu_custom_call.1} parent=15 // pred_check
          %p134 = pneg %p63
        $region22: #{tpu_custom_call.1} parent=15 // pred_check_branch
          %136 = sbr.rel (%p134) target = $region24
        $region23: #{tpu_custom_call.1} parent=15 // pred_region
          %s137 = sand.u32 %s53, 1
          %s138 = scalar_lea.sflag [#allocation6], %s137
          %s139 = sand.u32 %s53, 1
          %s140 = smul.addr %s139, 24
          %s141 = scalar_lea.vmem [#allocation5], %s140
          %s143 = ssub.s32 384, 384
          %144 = vsyncadd %s138, %s143
          %s145 = smul.addr %s17, 128
          %s146 = scalar_lea.hbm %s1, %s145
          %s147 = sshll.u32 %s141, 4
          %s148 = int_to_ptr.vmem [resolvable:$true] %s147
          %153 = dma.hbm_to_vmem [thread:$0]  %s146, 384, %s148, %s138, 256, 128, 8
        $region24: #{tpu_custom_call.1} parent=15 // pred_fallthru
          _
      $region16: #{tpu_custom_call.1} parent=5 // pred_fallthru
        _
      %p154 = scmp.le.s32.totalorder 1, %s17
      %p155 = scmp.lt.s32.totalorder %s17, 3
      %p156 = pnand %p154, %p155
      %p157 = pneg %p156
      // Predicated region
      $region25: #{tpu_custom_call.1} parent=5 // pred_check
        _
      $region26: #{tpu_custom_call.1} parent=5 // pred_check_branch
        %159 = sbr.rel (%p156) target = $region28
      $region27: #{tpu_custom_call.1} parent=5 // pred_region
        %s160 = ssub.s32 %s17, 1
        %s161 = sand.u32 %s30, 1
        %s162 = scalar_lea.sflag [#allocation3], %s161
        %s163 = sand.u32 %s30, 1
        %s164 = smul.addr %s163, 600
        %s165 = scalar_lea.vmem [#allocation2], %s164
        // Predicated region
        $region29: #{tpu_custom_call.1} parent=27 // pred_check
          %p166 = pneg %p43
        $region30: #{tpu_custom_call.1} parent=27 // pred_check_branch
          %168 = sbr.rel (%p166) target = $region32
        $region31: #{tpu_custom_call.1} parent=27 // pred_region
          %169 = dma.done %s162, 9600
        $region32: #{tpu_custom_call.1} parent=27 // pred_fallthru
          _
        %s170 = sand.u32 %s56, 1
        %s171 = scalar_lea.sflag [#allocation6], %s170
        %s172 = sand.u32 %s56, 1
        %s173 = smul.addr %s172, 24
        %s174 = scalar_lea.vmem [#allocation5], %s173
        // Predicated region
        $region33: #{tpu_custom_call.1} parent=27 // pred_check
          %p175 = pneg %p69
        $region34: #{tpu_custom_call.1} parent=27 // pred_check_branch
          %177 = sbr.rel (%p175) target = $region36
        $region35: #{tpu_custom_call.1} parent=27 // pred_region
          %178 = dma.done %s171, 384
        $region36: #{tpu_custom_call.1} parent=27 // pred_fallthru
          _
        %s179 = sand.u32 %s30, 1
        %s180 = scalar_lea.sflag [#allocation3], %s179
        %s181 = sand.u32 %s30, 1
        %s182 = smul.addr %s181, 600
        %s183 = scalar_lea.vmem [#allocation2], %s182
        %p184 = pneg %p43
        %p185 = pneg %p40
        %s186 = sand.u32 %s56, 1
        %s187 = scalar_lea.sflag [#allocation6], %s186
        %s188 = sand.u32 %s56, 1
        %s189 = smul.addr %s188, 24
        %s190 = scalar_lea.vmem [#allocation5], %s189
        %p191 = pneg %p69
        %p192 = pneg %p66
        %p193 = pneg %p95
        %p194 = pneg %p92
        %s195 = sand.u32 %s82, 1
        %s196 = scalar_lea.sflag [#allocation4], %s195
        %s197 = sand.u32 %s82, 1
        %s198 = smul.addr %s197, 24
        %s199 = scalar_lea.vmem [#allocation7], %s198
        %v200 = vld [vmem:[%s174] sm:$0xff]
        %s201 = scalar_lea.vmem %s174, 8 [#allocation5]
        %v202 = vld [vmem:[%s201] sm:$0xff]
        %s203 = scalar_lea.vmem %s174, 16 [#allocation5]
        %v204 = vld [vmem:[%s203] sm:$0xff]
        %v205 = vmul.f32 %v200, %v200
        %v206 = vmul.f32 %v202, %v202
        %v207 = vadd.f32 %v205, %v206
        %v208 = vmul.f32 %v204, %v204
        %v209 = vadd.f32 %v207, %v208
        %v210 = vmax.f32 %v209, 1e-24
        %v211 = vrsqrt.pop %v210
        %v212 = vmul.f32 %v200, %v211
        %v213 = vmul.f32 %v202, %v211
        %v214 = vmul.f32 %v204, %v211
        %v215 = vmul.f32 %v213, -0.48860252
        %v216 = vmul.f32 %v214, 0.48860252
        %v217 = vmul.f32 %v212, -0.48860252
        %v218 = vmul.f32 %v212, %v212
        %v219 = vmul.f32 %v213, %v213
        %v220 = vmul.f32 %v214, %v214
        %v221 = vmul.f32 %v212, %v213
        %v222 = vmul.f32 %v213, %v214
        %v223 = vmul.f32 %v212, %v214
        %v224 = vmul.f32 %v221, 1.0925485
        %v225 = vmul.f32 %v222, -1.0925485
        %v226 = vmul.f32 %v220, 2.0
        %v227 = vsub.f32 %v226, %v218
        %v228 = vsub.f32 %v227, %v219
        %v229 = vmul.f32 %v228, 0.31539157
        %v230 = vmul.f32 %v223, -1.0925485
        %v231 = vsub.f32 %v218, %v219
        %v232 = vmul.f32 %v231, 0.54627424
        %v233 = vmul.f32 %v213, -0.5900436
        %v234 = vmul.f32 %v218, 3.0
        %v235 = vsub.f32 %v234, %v219
        %v236 = vmul.f32 %v233, %v235
        %v237 = vmul.f32 %v221, 2.8906114
        %v238 = vmul.f32 %v237, %v214
        %v239 = vmul.f32 %v213, -0.4570458
        %v240 = vmul.f32 %v220, 4.0
        %v241 = vsub.f32 %v240, %v218
        %v242 = vsub.f32 %v241, %v219
        %v243 = vmul.f32 %v239, %v242
        %v244 = vmul.f32 %v214, 0.37317634
        %v245 = vsub.f32 %v226, %v234
        %v246 = vmul.f32 %v219, 3.0
        %v247 = vsub.f32 %v245, %v246
        %v248 = vmul.f32 %v244, %v247
        %v249 = vmul.f32 %v212, -0.4570458
        %v250 = vmul.f32 %v249, %v242
        %v251 = vmul.f32 %v214, 1.4453057
        %v252 = vmul.f32 %v251, %v231
        %v253 = vmul.f32 %v212, -0.5900436
        %v254 = vsub.f32 %v218, %v246
        %v255 = vmul.f32 %v253, %v254
        %v256 = vmul.f32 %v221, 2.5033429
        %v257 = vmul.f32 %v256, %v231
        %v258 = vmul.f32 %v222, -1.7701308
        %v259 = vmul.f32 %v258, %v235
        %v260 = vmul.f32 %v221, 0.9461747
        %v261 = vmul.f32 %v220, 7.0
        %v262 = vsub.f32 %v261, 1.0
        %v263 = vmul.f32 %v260, %v262
        %v264 = vmul.f32 %v222, -0.6690465
        %v265 = vsub.f32 %v261, 3.0
        %v266 = vmul.f32 %v264, %v265
        %v267 = vmul.f32 %v220, 35.0
        %v268 = vsub.f32 %v267, 30.0
        %v269 = vmul.f32 %v220, %v268
        %v270 = vadd.f32 %v269, 3.0
        %v271 = vmul.f32 %v270, 0.10578555
        %v272 = vmul.f32 %v223, -0.6690465
        %v273 = vmul.f32 %v272, %v265
        %v274 = vmul.f32 %v231, 0.47308734
        %v275 = vmul.f32 %v274, %v262
        %v276 = vmul.f32 %v223, -1.7701308
        %v277 = vmul.f32 %v276, %v254
        %v278 = vmul.f32 %v218, %v254
        %v279 = vmul.f32 %v219, %v235
        %v280 = vsub.f32 %v278, %v279
        %v281 = vmul.f32 %v280, 0.6258357
        %v282 = vld [vmem:[%s165] sm:$0xff]
        %v283 = vmul.f32 %v282, 0.2820948
        %s284 = scalar_lea.vmem %s165, 8 [#allocation2]
        %v285 = vld [vmem:[%s284] sm:$0xff]
        %v286 = vmul.f32 %v215, %v285
        %s287 = scalar_lea.vmem %s165, 16 [#allocation2]
        %v288 = vld [vmem:[%s287] sm:$0xff]
        %v289 = vmul.f32 %v216, %v288
        %s290 = scalar_lea.vmem %s165, 24 [#allocation2]
        %v291 = vld [vmem:[%s290] sm:$0xff]
        %v292 = vmul.f32 %v217, %v291
        %s293 = scalar_lea.vmem %s165, 32 [#allocation2]
        %v294 = vld [vmem:[%s293] sm:$0xff]
        %v295 = vmul.f32 %v224, %v294
        %v296 = vadd.f32 %v283, %v295
        %s297 = scalar_lea.vmem %s165, 40 [#allocation2]
        %v298 = vld [vmem:[%s297] sm:$0xff]
        %v299 = vmul.f32 %v225, %v298
        %v300 = vadd.f32 %v286, %v299
        %s301 = scalar_lea.vmem %s165, 48 [#allocation2]
        %v302 = vld [vmem:[%s301] sm:$0xff]
        %v303 = vmul.f32 %v229, %v302
        %v304 = vadd.f32 %v289, %v303
        %s305 = scalar_lea.vmem %s165, 56 [#allocation2]
        %v306 = vld [vmem:[%s305] sm:$0xff]
        %v307 = vmul.f32 %v230, %v306
        %v308 = vadd.f32 %v292, %v307
        %s309 = scalar_lea.vmem %s165, 64 [#allocation2]
        %v310 = vld [vmem:[%s309] sm:$0xff]
        %v311 = vmul.f32 %v232, %v310
        %v312 = vadd.f32 %v296, %v311
        %s313 = scalar_lea.vmem %s165, 72 [#allocation2]
        %v314 = vld [vmem:[%s313] sm:$0xff]
        %v315 = vmul.f32 %v236, %v314
        %v316 = vadd.f32 %v300, %v315
        %s317 = scalar_lea.vmem %s165, 80 [#allocation2]
        %v318 = vld [vmem:[%s317] sm:$0xff]
        %v319 = vmul.f32 %v238, %v318
        %v320 = vadd.f32 %v304, %v319
        %s321 = scalar_lea.vmem %s165, 88 [#allocation2]
        %v322 = vld [vmem:[%s321] sm:$0xff]
        %v323 = vmul.f32 %v243, %v322
        %v324 = vadd.f32 %v308, %v323
        %s325 = scalar_lea.vmem %s165, 96 [#allocation2]
        %v326 = vld [vmem:[%s325] sm:$0xff]
        %v327 = vmul.f32 %v248, %v326
        %v328 = vadd.f32 %v312, %v327
        %s329 = scalar_lea.vmem %s165, 104 [#allocation2]
        %v330 = vld [vmem:[%s329] sm:$0xff]
        %v331 = vmul.f32 %v250, %v330
        %v332 = vadd.f32 %v316, %v331
        %s333 = scalar_lea.vmem %s165, 112 [#allocation2]
        %v334 = vld [vmem:[%s333] sm:$0xff]
        %v335 = vmul.f32 %v252, %v334
        %v336 = vadd.f32 %v320, %v335
        %s337 = scalar_lea.vmem %s165, 120 [#allocation2]
        %v338 = vld [vmem:[%s337] sm:$0xff]
        %v339 = vmul.f32 %v255, %v338
        %v340 = vadd.f32 %v324, %v339
        %s341 = scalar_lea.vmem %s165, 128 [#allocation2]
        %v342 = vld [vmem:[%s341] sm:$0xff]
        %v343 = vmul.f32 %v257, %v342
        %v344 = vadd.f32 %v328, %v343
        %s345 = scalar_lea.vmem %s165, 136 [#allocation2]
        %v346 = vld [vmem:[%s345] sm:$0xff]
        %v347 = vmul.f32 %v259, %v346
        %v348 = vadd.f32 %v332, %v347
        %s349 = scalar_lea.vmem %s165, 144 [#allocation2]
        %v350 = vld [vmem:[%s349] sm:$0xff]
        %v351 = vmul.f32 %v263, %v350
        %v352 = vadd.f32 %v336, %v351
        %s353 = scalar_lea.vmem %s165, 152 [#allocation2]
        %v354 = vld [vmem:[%s353] sm:$0xff]
        %v355 = vmul.f32 %v266, %v354
        %v356 = vadd.f32 %v340, %v355
        %s357 = scalar_lea.vmem %s165, 160 [#allocation2]
        %v358 = vld [vmem:[%s357] sm:$0xff]
        %v359 = vmul.f32 %v271, %v358
        %v360 = vadd.f32 %v344, %v359
        %s361 = scalar_lea.vmem %s165, 168 [#allocation2]
        %v362 = vld [vmem:[%s361] sm:$0xff]
        %v363 = vmul.f32 %v273, %v362
        %v364 = vadd.f32 %v348, %v363
        %s365 = scalar_lea.vmem %s165, 176 [#allocation2]
        %v366 = vld [vmem:[%s365] sm:$0xff]
        %v367 = vmul.f32 %v275, %v366
        %v368 = vadd.f32 %v352, %v367
        %s369 = scalar_lea.vmem %s165, 184 [#allocation2]
        %v370 = vld [vmem:[%s369] sm:$0xff]
        %v371 = vmul.f32 %v277, %v370
        %v372 = vadd.f32 %v356, %v371
        %s373 = scalar_lea.vmem %s165, 192 [#allocation2]
        %v374 = vld [vmem:[%s373] sm:$0xff]
        %v375 = vmul.f32 %v281, %v374
        %v376 = vadd.f32 %v360, %v375
        %v377 = vadd.f32 %v376, %v364
        %v378 = vadd.f32 %v377, %v368
        %v379 = vadd.f32 %v378, %v372
        %380 = vst [vmem:[%s199] sm:$0xff] %v379
        %s381 = scalar_lea.vmem %s165, 200 [#allocation2]
        %v382 = vld [vmem:[%s381] sm:$0xff]
        %v383 = vmul.f32 %v382, 0.2820948
        %s384 = scalar_lea.vmem %s165, 208 [#allocation2]
        %v385 = vld [vmem:[%s384] sm:$0xff]
        %v386 = vmul.f32 %v215, %v385
        %s387 = scalar_lea.vmem %s165, 216 [#allocation2]
        %v388 = vld [vmem:[%s387] sm:$0xff]
        %v389 = vmul.f32 %v216, %v388
        %s390 = scalar_lea.vmem %s165, 224 [#allocation2]
        %v391 = vld [vmem:[%s390] sm:$0xff]
        %v392 = vmul.f32 %v217, %v391
        %s393 = scalar_lea.vmem %s165, 232 [#allocation2]
        %v394 = vld [vmem:[%s393] sm:$0xff]
        %v395 = vmul.f32 %v224, %v394
        %v396 = vadd.f32 %v383, %v395
        %s397 = scalar_lea.vmem %s165, 240 [#allocation2]
        %v398 = vld [vmem:[%s397] sm:$0xff]
        %v399 = vmul.f32 %v225, %v398
        %v400 = vadd.f32 %v386, %v399
        %s401 = scalar_lea.vmem %s165, 248 [#allocation2]
        %v402 = vld [vmem:[%s401] sm:$0xff]
        %v403 = vmul.f32 %v229, %v402
        %v404 = vadd.f32 %v389, %v403
        %s405 = scalar_lea.vmem %s165, 256 [#allocation2]
        %v406 = vld [vmem:[%s405] sm:$0xff]
        %v407 = vmul.f32 %v230, %v406
        %v408 = vadd.f32 %v392, %v407
        %s409 = scalar_lea.vmem %s165, 264 [#allocation2]
        %v410 = vld [vmem:[%s409] sm:$0xff]
        %v411 = vmul.f32 %v232, %v410
        %v412 = vadd.f32 %v396, %v411
        %s413 = scalar_lea.vmem %s165, 272 [#allocation2]
        %v414 = vld [vmem:[%s413] sm:$0xff]
        %v415 = vmul.f32 %v236, %v414
        %v416 = vadd.f32 %v400, %v415
        %s417 = scalar_lea.vmem %s165, 280 [#allocation2]
        %v418 = vld [vmem:[%s417] sm:$0xff]
        %v419 = vmul.f32 %v238, %v418
        %v420 = vadd.f32 %v404, %v419
        %s421 = scalar_lea.vmem %s165, 288 [#allocation2]
        %v422 = vld [vmem:[%s421] sm:$0xff]
        %v423 = vmul.f32 %v243, %v422
        %v424 = vadd.f32 %v408, %v423
        %s425 = scalar_lea.vmem %s165, 296 [#allocation2]
        %v426 = vld [vmem:[%s425] sm:$0xff]
        %v427 = vmul.f32 %v248, %v426
        %v428 = vadd.f32 %v412, %v427
        %s429 = scalar_lea.vmem %s165, 304 [#allocation2]
        %v430 = vld [vmem:[%s429] sm:$0xff]
        %v431 = vmul.f32 %v250, %v430
        %v432 = vadd.f32 %v416, %v431
        %s433 = scalar_lea.vmem %s165, 312 [#allocation2]
        %v434 = vld [vmem:[%s433] sm:$0xff]
        %v435 = vmul.f32 %v252, %v434
        %v436 = vadd.f32 %v420, %v435
        %s437 = scalar_lea.vmem %s165, 320 [#allocation2]
        %v438 = vld [vmem:[%s437] sm:$0xff]
        %v439 = vmul.f32 %v255, %v438
        %v440 = vadd.f32 %v424, %v439
        %s441 = scalar_lea.vmem %s165, 328 [#allocation2]
        %v442 = vld [vmem:[%s441] sm:$0xff]
        %v443 = vmul.f32 %v257, %v442
        %v444 = vadd.f32 %v428, %v443
        %s445 = scalar_lea.vmem %s165, 336 [#allocation2]
        %v446 = vld [vmem:[%s445] sm:$0xff]
        %v447 = vmul.f32 %v259, %v446
        %v448 = vadd.f32 %v432, %v447
        %s449 = scalar_lea.vmem %s165, 344 [#allocation2]
        %v450 = vld [vmem:[%s449] sm:$0xff]
        %v451 = vmul.f32 %v263, %v450
        %v452 = vadd.f32 %v436, %v451
        %s453 = scalar_lea.vmem %s165, 352 [#allocation2]
        %v454 = vld [vmem:[%s453] sm:$0xff]
        %v455 = vmul.f32 %v266, %v454
        %v456 = vadd.f32 %v440, %v455
        %s457 = scalar_lea.vmem %s165, 360 [#allocation2]
        %v458 = vld [vmem:[%s457] sm:$0xff]
        %v459 = vmul.f32 %v271, %v458
        %v460 = vadd.f32 %v444, %v459
        %s461 = scalar_lea.vmem %s165, 368 [#allocation2]
        %v462 = vld [vmem:[%s461] sm:$0xff]
        %v463 = vmul.f32 %v273, %v462
        %v464 = vadd.f32 %v448, %v463
        %s465 = scalar_lea.vmem %s165, 376 [#allocation2]
        %v466 = vld [vmem:[%s465] sm:$0xff]
        %v467 = vmul.f32 %v275, %v466
        %v468 = vadd.f32 %v452, %v467
        %s469 = scalar_lea.vmem %s165, 384 [#allocation2]
        %v470 = vld [vmem:[%s469] sm:$0xff]
        %v471 = vmul.f32 %v277, %v470
        %v472 = vadd.f32 %v456, %v471
        %s473 = scalar_lea.vmem %s165, 392 [#allocation2]
        %v474 = vld [vmem:[%s473] sm:$0xff]
        %v475 = vmul.f32 %v281, %v474
        %v476 = vadd.f32 %v460, %v475
        %v477 = vadd.f32 %v476, %v464
        %v478 = vadd.f32 %v477, %v468
        %v479 = vadd.f32 %v478, %v472
        %s480 = scalar_lea.vmem %s199, 8 [#allocation7]
        %481 = vst [vmem:[%s480] sm:$0xff] %v479
        %s482 = scalar_lea.vmem %s165, 400 [#allocation2]
        %v483 = vld [vmem:[%s482] sm:$0xff]
        %v484 = vmul.f32 %v483, 0.2820948
        %s485 = scalar_lea.vmem %s165, 408 [#allocation2]
        %v486 = vld [vmem:[%s485] sm:$0xff]
        %v487 = vmul.f32 %v215, %v486
        %s488 = scalar_lea.vmem %s165, 416 [#allocation2]
        %v489 = vld [vmem:[%s488] sm:$0xff]
        %v490 = vmul.f32 %v216, %v489
        %s491 = scalar_lea.vmem %s165, 424 [#allocation2]
        %v492 = vld [vmem:[%s491] sm:$0xff]
        %v493 = vmul.f32 %v217, %v492
        %s494 = scalar_lea.vmem %s165, 432 [#allocation2]
        %v495 = vld [vmem:[%s494] sm:$0xff]
        %v496 = vmul.f32 %v224, %v495
        %v497 = vadd.f32 %v484, %v496
        %s498 = scalar_lea.vmem %s165, 440 [#allocation2]
        %v499 = vld [vmem:[%s498] sm:$0xff]
        %v500 = vmul.f32 %v225, %v499
        %v501 = vadd.f32 %v487, %v500
        %s502 = scalar_lea.vmem %s165, 448 [#allocation2]
        %v503 = vld [vmem:[%s502] sm:$0xff]
        %v504 = vmul.f32 %v229, %v503
        %v505 = vadd.f32 %v490, %v504
        %s506 = scalar_lea.vmem %s165, 456 [#allocation2]
        %v507 = vld [vmem:[%s506] sm:$0xff]
        %v508 = vmul.f32 %v230, %v507
        %v509 = vadd.f32 %v493, %v508
        %s510 = scalar_lea.vmem %s165, 464 [#allocation2]
        %v511 = vld [vmem:[%s510] sm:$0xff]
        %v512 = vmul.f32 %v232, %v511
        %v513 = vadd.f32 %v497, %v512
        %s514 = scalar_lea.vmem %s165, 472 [#allocation2]
        %v515 = vld [vmem:[%s514] sm:$0xff]
        %v516 = vmul.f32 %v236, %v515
        %v517 = vadd.f32 %v501, %v516
        %s518 = scalar_lea.vmem %s165, 480 [#allocation2]
        %v519 = vld [vmem:[%s518] sm:$0xff]
        %v520 = vmul.f32 %v238, %v519
        %v521 = vadd.f32 %v505, %v520
        %s522 = scalar_lea.vmem %s165, 488 [#allocation2]
        %v523 = vld [vmem:[%s522] sm:$0xff]
        %v524 = vmul.f32 %v243, %v523
        %v525 = vadd.f32 %v509, %v524
        %s526 = scalar_lea.vmem %s165, 496 [#allocation2]
        %v527 = vld [vmem:[%s526] sm:$0xff]
        %v528 = vmul.f32 %v248, %v527
        %v529 = vadd.f32 %v513, %v528
        %s530 = scalar_lea.vmem %s165, 504 [#allocation2]
        %v531 = vld [vmem:[%s530] sm:$0xff]
        %v532 = vmul.f32 %v250, %v531
        %v533 = vadd.f32 %v517, %v532
        %s534 = scalar_lea.vmem %s165, 512 [#allocation2]
        %v535 = vld [vmem:[%s534] sm:$0xff]
        %v536 = vmul.f32 %v252, %v535
        %v537 = vadd.f32 %v521, %v536
        %s538 = scalar_lea.vmem %s165, 520 [#allocation2]
        %v539 = vld [vmem:[%s538] sm:$0xff]
        %v540 = vmul.f32 %v255, %v539
        %v541 = vadd.f32 %v525, %v540
        %s542 = scalar_lea.vmem %s165, 528 [#allocation2]
        %v543 = vld [vmem:[%s542] sm:$0xff]
        %v544 = vmul.f32 %v257, %v543
        %v545 = vadd.f32 %v529, %v544
        %s546 = scalar_lea.vmem %s165, 536 [#allocation2]
        %v547 = vld [vmem:[%s546] sm:$0xff]
        %v548 = vmul.f32 %v259, %v547
        %v549 = vadd.f32 %v533, %v548
        %s550 = scalar_lea.vmem %s165, 544 [#allocation2]
        %v551 = vld [vmem:[%s550] sm:$0xff]
        %v552 = vmul.f32 %v263, %v551
        %v553 = vadd.f32 %v537, %v552
        %s554 = scalar_lea.vmem %s165, 552 [#allocation2]
        %v555 = vld [vmem:[%s554] sm:$0xff]
        %v556 = vmul.f32 %v266, %v555
        %v557 = vadd.f32 %v541, %v556
        %s558 = scalar_lea.vmem %s165, 560 [#allocation2]
        %v559 = vld [vmem:[%s558] sm:$0xff]
        %v560 = vmul.f32 %v271, %v559
        %v561 = vadd.f32 %v545, %v560
        %s562 = scalar_lea.vmem %s165, 568 [#allocation2]
        %v563 = vld [vmem:[%s562] sm:$0xff]
        %v564 = vmul.f32 %v273, %v563
        %v565 = vadd.f32 %v549, %v564
        %s566 = scalar_lea.vmem %s165, 576 [#allocation2]
        %v567 = vld [vmem:[%s566] sm:$0xff]
        %v568 = vmul.f32 %v275, %v567
        %v569 = vadd.f32 %v553, %v568
        %s570 = scalar_lea.vmem %s165, 584 [#allocation2]
        %v571 = vld [vmem:[%s570] sm:$0xff]
        %v572 = vmul.f32 %v277, %v571
        %v573 = vadd.f32 %v557, %v572
        %s574 = scalar_lea.vmem %s165, 592 [#allocation2]
        %v575 = vld [vmem:[%s574] sm:$0xff]
        %v576 = vmul.f32 %v281, %v575
        %v577 = vadd.f32 %v561, %v576
        %v578 = vadd.f32 %v577, %v565
        %v579 = vadd.f32 %v578, %v569
        %v580 = vadd.f32 %v579, %v573
        %s581 = scalar_lea.vmem %s199, 16 [#allocation7]
        %582 = vst [vmem:[%s581] sm:$0xff] %v580
        %s583 = sand.u32 %s82, 1
        %s584 = scalar_lea.sflag [#allocation4], %s583
        %s585 = sand.u32 %s82, 1
        %s586 = smul.addr %s585, 24
        %s587 = scalar_lea.vmem [#allocation7], %s586
        // Predicated region
        $region37: #{tpu_custom_call.1} parent=27 // pred_check
          %p588 = pneg %p92
        $region38: #{tpu_custom_call.1} parent=27 // pred_check_branch
          %590 = sbr.rel (%p588) target = $region40
        $region39: #{tpu_custom_call.1} parent=27 // pred_region
          %s592 = ssub.s32 384, 384
          %593 = vsyncadd %s584, %s592
          %s594 = smul.addr %s22, 128
          %s595 = scalar_lea.hbm %s2, %s594
          %s596 = sshll.u32 %s587, 4
          %s597 = int_to_ptr.vmem [resolvable:$true] %s596
          %602 = dma.vmem_to_hbm [thread:$0]  %s597, 384, %s595, %s584, 128, 256, 8
        $region40: #{tpu_custom_call.1} parent=27 // pred_fallthru
          _
      $region28: #{tpu_custom_call.1} parent=5 // pred_fallthru
        _
      %p603 = scmp.le.s32.totalorder 2, %s17
      // Predicated region
      $region41: #{tpu_custom_call.1} parent=5 // pred_check
        %p604 = pneg %p603
      $region42: #{tpu_custom_call.1} parent=5 // pred_check_branch
        %606 = sbr.rel (%p604) target = $region44
      $region43: #{tpu_custom_call.1} parent=5 // pred_region
        %s607 = ssub.s32 %s17, 2
        // Predicated region
        $region45: #{tpu_custom_call.1} parent=43 // pred_check
          %p608 = pneg %p98
        $region46: #{tpu_custom_call.1} parent=43 // pred_check_branch
          %610 = sbr.rel (%p608) target = $region48
        $region47: #{tpu_custom_call.1} parent=43 // pred_region
          %s611 = sand.u32 %s83, 1
          %s612 = scalar_lea.sflag [#allocation4], %s611
          %s613 = sand.u32 %s83, 1
          %s614 = smul.addr %s613, 24
          %s615 = scalar_lea.vmem [#allocation7], %s614
          %616 = dma.done %s612, 384
        $region48: #{tpu_custom_call.1} parent=43 // pred_fallthru
          _
      $region44: #{tpu_custom_call.1} parent=5 // pred_fallthru
        _
    $region6: #{tpu_custom_call.1} parent=1 // loop_footer
      %s21 = sadd.s32 1, %s17
    $region7: #{tpu_custom_call.1} parent=1 // loop_footer_branch
      %16 = sbr.rel target = $region3
    $region8: #{tpu_custom_call.1} parent=1 // loop_exit
      _
    %617 = vsyncpa [#allocation3], 1
    %s618 = scalar_lea.sflag [#allocation3], 1
    %619 = vsyncpa %s618, 1
    %620 = vsyncpa [#allocation6], 1
    %s621 = scalar_lea.sflag [#allocation6], 1
    %622 = vsyncpa %s621, 1
    %623 = vsyncpa [#allocation4], 1
    %s624 = scalar_lea.sflag [#allocation4], 1
    %625 = vsyncpa %s624, 1

</llo_original>
